<compile_context>
chip_gen: v7x
topology: tpu7x:2x2x1
jax: 0.10.0
libtpu: 0.0.40
codegen_flags: <defaults>
</compile_context>

<pallas_src>
import functools

import jax
import jax.numpy as jnp
from jax.experimental import pallas as pl
from jax.experimental.pallas import tpu as pltpu


# ---------------------------------------------------------------------------
# Fused Pallas kernel: base 3x3 conv + ReLU + all head 1x1 convs
# ---------------------------------------------------------------------------
def _shell_fused_kernel(x_ref, wb_ref, bb_ref, wh_ref, bh_ref, *rest,
                        H, W, Cin, TH, head_channels):
    """One (batch, row-tile) step of the fused Shell forward.

    x_ref  : (1, H, W, Cin)   f32  full image of current batch element
                                   (block index constant across row tiles -> DMA'd once)
    wb_ref : (9*Cin, Cbase)   bf16 base 3x3 conv weights reshaped for im2col
    bb_ref : (1, Cbase)       f32
    wh_ref : (Cbase, Ctot)    bf16 all active head 1x1 weights, concatenated
    bh_ref : (1, Ctot)        f32
    rest   : per-head output refs (1, TH, W, Ch_i) f32,
             then pad_ref (H+2, W+2, Cin) f32  (persistent halo-padded image),
             then col_ref (TH, W, 9*Cin) bf16  (im2col staging scratch).
    """
    out_refs = rest[:-2]
    pad_ref = rest[-2]
    col_ref = rest[-1]
    r = pl.program_id(1)

    # Build the zero-padded (1-px halo) copy of this batch element's image once;
    # scratch persists across grid steps, so all row tiles of this batch reuse it.
    @pl.when(r == 0)
    def _():
        pad_ref[...] = jnp.zeros_like(pad_ref)
        pad_ref[1:H + 1, 1:W + 1, :] = x_ref[0]

    # im2col: assemble the (TH, W, 9*Cin) patch tensor for this row tile in VMEM.
    # Layout keeps (row, col) in place so the 9 shifted copies need no reshapes;
    # a single (TH*W, 9*Cin) view then feeds ONE K=9*Cin MXU matmul
    # (instead of nine K=Cin matmuls).
    row0 = pl.multiple_of(r * TH, TH)
    k = 0
    for dy in range(3):
        for dx in range(3):
            piece = pad_ref[pl.ds(row0 + dy, TH), dx:dx + W, :]        # (TH, W, Cin) f32
            col_ref[:, :, k * Cin:(k + 1) * Cin] = piece.astype(col_ref.dtype)
            k += 1
    patches = col_ref[...].reshape(TH * W, 9 * Cin)                    # bf16

    # Base conv + bias + ReLU; features never leave the chip.
    feat = jnp.dot(patches, wb_ref[...], preferred_element_type=jnp.float32)
    feat = jnp.maximum(feat + bb_ref[...], 0.0)                        # f32 (TH*W, Cbase)

    # All heads fused into one matmul against the concatenated head weights.
    y = jnp.dot(feat.astype(wh_ref.dtype), wh_ref[...],
                preferred_element_type=jnp.float32) + bh_ref[...]      # f32 (TH*W, Ctot)

    off = 0
    for o_ref, ch in zip(out_refs, head_channels):
        o_ref[...] = y[:, off:off + ch].reshape(1, TH, W, ch).astype(o_ref.dtype)
        off += ch


# ---------------------------------------------------------------------------
# pallas_call wrapper
# ---------------------------------------------------------------------------
def shell_fused_forward(x_nhwc, wb, bb, wh, bh, head_channels, *, tile_h=None):
    """x_nhwc (B,H,W,Cin) f32 -> tuple of per-head NHWC outputs (B,H,W,Ch_i) f32."""
    B, H, W, Cin = x_nhwc.shape
    Cbase = wb.shape[1]
    Ctot = wh.shape[1]
    head_channels = tuple(int(c) for c in head_channels)
    assert sum(head_channels) == Ctot

    TH = tile_h if tile_h is not None else (8 if H % 8 == 0 else H)
    assert H % TH == 0
    R = H // TH

    kernel = functools.partial(_shell_fused_kernel, H=H, W=W, Cin=Cin, TH=TH,
                               head_channels=head_channels)

    out_shape = tuple(jax.ShapeDtypeStruct((B, H, W, ch), jnp.float32)
                      for ch in head_channels)
    out_specs = tuple(pl.BlockSpec((1, TH, W, ch), lambda b, r: (b, r, 0, 0))
                      for ch in head_channels)
    in_specs = [
        # Whole image per batch element; block index is constant over the row-tile
        # axis so it stays resident in VMEM while all row tiles are processed.
        pl.BlockSpec((1, H, W, Cin), lambda b, r: (b, 0, 0, 0)),
        pl.BlockSpec((9 * Cin, Cbase), lambda b, r: (0, 0)),
        pl.BlockSpec((1, Cbase), lambda b, r: (0, 0)),
        pl.BlockSpec((Cbase, Ctot), lambda b, r: (0, 0)),
        pl.BlockSpec((1, Ctot), lambda b, r: (0, 0)),
    ]

    return pl.pallas_call(
        kernel,
        out_shape=out_shape,
        grid_spec=pltpu.PrefetchScalarGridSpec(
            num_scalar_prefetch=0,
            grid=(B, R),
            in_specs=in_specs,
            out_specs=out_specs,
            scratch_shapes=[
                pltpu.VMEM((H + 2, W + 2, Cin), jnp.float32),      # halo-padded image
                pltpu.VMEM((TH, W, 9 * Cin), jnp.bfloat16),        # im2col staging
            ],
        ),
        compiler_params=pltpu.CompilerParams(
            dimension_semantics=("parallel", "arbitrary"),
            vmem_limit_bytes=32 * 1024 * 1024,
        ),
    )(x_nhwc, wb, bb, wh, bh)


# ---------------------------------------------------------------------------
# Shell (JAX/Pallas version of the PyTorch module)
# ---------------------------------------------------------------------------
class PallasShell:
    """Mirrors openpifpaf Shell.forward semantics (NCHW in, NCHW head outputs)."""

    def __init__(self, base_params, head_params, *, depth_net=None, base_stride=1,
                 process_input=None, process_heads=None):
        base_w, base_b = base_params                     # (3,3,Cin,Cbase), (Cbase,)
        kh, kw, cin, cbase = base_w.shape
        assert (kh, kw) == (3, 3)
        # Pre-reshape/cast parameters once (outside the kernel): im2col layout + bf16.
        self.wb = jnp.asarray(base_w, jnp.float32).reshape(9 * cin, cbase).astype(jnp.bfloat16)
        self.bb = jnp.asarray(base_b, jnp.float32).reshape(1, cbase)
        self.head_ws = [jnp.asarray(w, jnp.float32).astype(jnp.bfloat16) for w, _ in head_params]
        self.head_bs = [jnp.asarray(b, jnp.float32) for _, b in head_params]
        self.head_channels = [int(w.shape[1]) for w in self.head_ws]

        self.depth_net = depth_net          # stored for parity with Shell; unused in forward
        self.base_stride = base_stride      # meta only (Shell.set_head_nets bookkeeping)
        self.process_input = process_input
        self.process_heads = process_heads

    def __call__(self, image_batch, head_mask=None):
        if self.process_input is not None:
            image_batch = self.process_input(image_batch)

        n_heads = len(self.head_ws)
        if head_mask is not None:
            active = [i for i, m in enumerate(head_mask) if m]
        else:
            active = list(range(n_heads))

        head_outputs = [None] * n_heads
        if active:
            # Fuse the active heads' 1x1 convs into one matmul inside the kernel.
            wh = jnp.concatenate([self.head_ws[i] for i in active], axis=1)
            bh = jnp.concatenate([self.head_bs[i] for i in active]).reshape(1, -1)
            chs = [self.head_channels[i] for i in active]

            x_nhwc = jnp.transpose(image_batch, (0, 2, 3, 1))        # NCHW -> NHWC once
            outs_nhwc = shell_fused_forward(x_nhwc, self.wb, self.bb, wh, bh, chs)
            for i, out in zip(active, outs_nhwc):
                head_outputs[i] = jnp.transpose(out, (0, 3, 1, 2))   # NHWC -> NCHW

        head_outputs = tuple(head_outputs)
        if self.process_heads is not None:
            head_outputs = self.process_heads(head_outputs)
        return head_outputs


# ---------------------------------------------------------------------------
# Pure-JAX reference (for the correctness check)
# ---------------------------------------------------------------------------
def reference_forward(image_batch, base_params, head_params):
    x = jnp.transpose(image_batch, (0, 2, 3, 1))
    w, b = base_params
    feat = jax.lax.conv_general_dilated(
        x, w, window_strides=(1, 1), padding="SAME",
        dimension_numbers=("NHWC", "HWIO", "NHWC"))
    feat = jnp.maximum(feat + b, 0.0)
    outs = []
    for hw, hb in head_params:
        y = jnp.einsum("bhwc,cd->bhwd", feat, hw) + hb
        outs.append(jnp.transpose(y, (0, 3, 1, 2)))
    return tuple(outs)


# ---------------------------------------------------------------------------
if __name__ == "__main__":
    B, Cin, H, W = 2, 4, 16, 16
    Cbase = 32
    head_channels = (8, 12)   # e.g. two composite-field heads

    key = jax.random.PRNGKey(0)
    k_img, k_bw, k_bb, *k_heads = jax.random.split(key, 3 + 2 * len(head_channels))

    image_batch = jax.random.normal(k_img, (B, Cin, H, W), jnp.float32)  # NCHW input

    base_w = jax.random.normal(k_bw, (3, 3, Cin, Cbase), jnp.float32) * 0.1
    base_b = jax.random.normal(k_bb, (Cbase,), jnp.float32) * 0.1
    head_params = []
    for i, ch in enumerate(head_channels):
        hw = jax.random.normal(k_heads[2 * i], (Cbase, ch), jnp.float32) * 0.1
        hb = jax.random.normal(k_heads[2 * i + 1], (ch,), jnp.float32) * 0.1
        head_params.append((hw, hb))

    shell = PallasShell((base_w, base_b), head_params, base_stride=1)

    # Full forward (all heads).
    head_outputs = jax.block_until_ready(shell(image_batch))

    # head_mask path (second head masked out -> None), like Shell.forward.
    masked_outputs = shell(image_batch, head_mask=[True, False])
    jax.block_until_ready([o for o in masked_outputs if o is not None])
    assert masked_outputs[1] is None

    # Correctness check against pure-JAX f32 reference (kernel matmuls are bf16).
    ref_outputs = reference_forward(image_batch, (base_w, base_b), head_params)
    for got, ref, ch in zip(head_outputs, ref_outputs, head_channels):
        assert got.shape == (B, ch, H, W), got.shape
        assert jnp.allclose(got, ref, atol=5e-2, rtol=5e-2), "mismatch vs reference"
    assert jnp.allclose(masked_outputs[0], ref_outputs[0], atol=5e-2, rtol=5e-2)

    print("KERNEL_OK")
</pallas_src>

<mosaic_0001>
module attributes {stable_mosaic.version = 11 : i64} {
  func.func @_shell_fused_kernel(%arg0: i32, %arg1: i32, %arg2: memref<1x16x16x4xf32, #tpu.memory_space<vmem>>, %arg3: memref<36x32xbf16, #tpu.memory_space<vmem>>, %arg4: memref<1x32xf32, #tpu.memory_space<vmem>>, %arg5: memref<32x20xbf16, #tpu.memory_space<vmem>>, %arg6: memref<1x20xf32, #tpu.memory_space<vmem>>, %arg7: memref<1x8x16x8xf32, #tpu.memory_space<vmem>>, %arg8: memref<1x8x16x12xf32, #tpu.memory_space<vmem>>, %arg9: memref<18x18x4xf32, #tpu.memory_space<vmem>>, %arg10: memref<8x16x36xbf16, #tpu.memory_space<vmem>>) attributes {dimension_semantics = [#tpu.dimension_semantics<parallel>, #tpu.dimension_semantics<arbitrary>], iteration_bounds = array<i64: 2, 2>, scalar_prefetch = 0 : i64, scratch_operands = 2 : i64, tpu.core_type = #tpu.core_type<tc>, window_params = [{transform_indices = @transform_0, window_bounds = array<i64: 1, 16, 16, 4>}, {pipeline_mode = #tpu.pipeline_mode<synchronous>, transform_indices = @transform_1, window_bounds = array<i64: 36, 32>}, {pipeline_mode = #tpu.pipeline_mode<synchronous>, transform_indices = @transform_2, window_bounds = array<i64: 1, 32>}, {pipeline_mode = #tpu.pipeline_mode<synchronous>, transform_indices = @transform_3, window_bounds = array<i64: 32, 20>}, {pipeline_mode = #tpu.pipeline_mode<synchronous>, transform_indices = @transform_4, window_bounds = array<i64: 1, 20>}, {transform_indices = @transform_5, window_bounds = array<i64: 1, 8, 16, 8>}, {transform_indices = @transform_6, window_bounds = array<i64: 1, 8, 16, 12>}]} {
    %c0_i32 = arith.constant 0 : i32
    %0 = arith.cmpi eq, %arg1, %c0_i32 : i32
    %1 = arith.extui %0 : i1 to i32
    %c0_i32_0 = arith.constant 0 : i32
    %2 = arith.cmpi ne, %1, %c0_i32_0 : i32
    scf.if %2 {
      %cst_63 = arith.constant 0.000000e+00 : f32
      %71 = vector.broadcast %cst_63 : f32 to vector<18x18x4xf32>
      %c0_64 = arith.constant 0 : index
      %c0_65 = arith.constant 0 : index
      %c0_66 = arith.constant 0 : index
      %72 = vector.load %arg9[%c0_64, %c0_65, %c0_66] : memref<18x18x4xf32, #tpu.memory_space<vmem>>, vector<18x18x4xf32>
      tpu.vector_store %arg9[%c0_64, %c0_65, %c0_66], %71 {strides = array<i32>} : memref<18x18x4xf32, #tpu.memory_space<vmem>>, vector<18x18x4xf32>,
      %c0_67 = arith.constant 0 : index
      %c0_68 = arith.constant 0 : index
      %c0_69 = arith.constant 0 : index
      %c0_70 = arith.constant 0 : index
      %73 = vector.load %arg2[%c0_67, %c0_68, %c0_69, %c0_70] : memref<1x16x16x4xf32, #tpu.memory_space<vmem>>, vector<1x16x16x4xf32>
      %74 = vector.shape_cast %73 : vector<1x16x16x4xf32> to vector<16x16x4xf32>
      %c1_71 = arith.constant 1 : index
      %c1_72 = arith.constant 1 : index
      %c0_73 = arith.constant 0 : index
      %75 = vector.load %arg9[%c1_71, %c1_72, %c0_73] : memref<18x18x4xf32, #tpu.memory_space<vmem>>, vector<16x16x4xf32>
      tpu.vector_store %arg9[%c1_71, %c1_72, %c0_73], %74 {strides = array<i32>} : memref<18x18x4xf32, #tpu.memory_space<vmem>>, vector<16x16x4xf32>,
    } else {
    }
    %c8_i32 = arith.constant 8 : i32
    %3 = arith.muli %arg1, %c8_i32 : i32
    %4 = tpu.assume_multiple %3, 8 : i32
    %c0_i32_1 = arith.constant 0 : i32
    %5 = arith.addi %4, %c0_i32_1 : i32
    %6 = arith.index_cast %5 : i32 to index
    %c0 = arith.constant 0 : index
    %c0_2 = arith.constant 0 : index
    %7 = vector.load %arg9[%6, %c0, %c0_2] : memref<18x18x4xf32, #tpu.memory_space<vmem>>, vector<8x16x4xf32>
    %8 = arith.truncf %7 : vector<8x16x4xf32> to vector<8x16x4xbf16>
    %c0_3 = arith.constant 0 : index
    %c0_4 = arith.constant 0 : index
    %c0_5 = arith.constant 0 : index
    %9 = vector.load %arg10[%c0_3, %c0_4, %c0_5] : memref<8x16x36xbf16, #tpu.memory_space<vmem>>, vector<8x16x4xbf16>
    tpu.vector_store %arg10[%c0_3, %c0_4, %c0_5], %8 {strides = array<i32>} : memref<8x16x36xbf16, #tpu.memory_space<vmem>>, vector<8x16x4xbf16>,
    %c0_i32_6 = arith.constant 0 : i32
    %10 = arith.addi %4, %c0_i32_6 : i32
    %11 = arith.index_cast %10 : i32 to index
    %c1 = arith.constant 1 : index
    %c0_7 = arith.constant 0 : index
    %12 = vector.load %arg9[%11, %c1, %c0_7] : memref<18x18x4xf32, #tpu.memory_space<vmem>>, vector<8x16x4xf32>
    %13 = arith.truncf %12 : vector<8x16x4xf32> to vector<8x16x4xbf16>
    %c0_8 = arith.constant 0 : index
    %c0_9 = arith.constant 0 : index
    %c4 = arith.constant 4 : index
    %14 = vector.load %arg10[%c0_8, %c0_9, %c4] : memref<8x16x36xbf16, #tpu.memory_space<vmem>>, vector<8x16x4xbf16>
    tpu.vector_store %arg10[%c0_8, %c0_9, %c4], %13 {strides = array<i32>} : memref<8x16x36xbf16, #tpu.memory_space<vmem>>, vector<8x16x4xbf16>,
    %c0_i32_10 = arith.constant 0 : i32
    %15 = arith.addi %4, %c0_i32_10 : i32
    %16 = arith.index_cast %15 : i32 to index
    %c2 = arith.constant 2 : index
    %c0_11 = arith.constant 0 : index
    %17 = vector.load %arg9[%16, %c2, %c0_11] : memref<18x18x4xf32, #tpu.memory_space<vmem>>, vector<8x16x4xf32>
    %18 = arith.truncf %17 : vector<8x16x4xf32> to vector<8x16x4xbf16>
    %c0_12 = arith.constant 0 : index
    %c0_13 = arith.constant 0 : index
    %c8 = arith.constant 8 : index
    %19 = vector.load %arg10[%c0_12, %c0_13, %c8] : memref<8x16x36xbf16, #tpu.memory_space<vmem>>, vector<8x16x4xbf16>
    tpu.vector_store %arg10[%c0_12, %c0_13, %c8], %18 {strides = array<i32>} : memref<8x16x36xbf16, #tpu.memory_space<vmem>>, vector<8x16x4xbf16>,
    %c1_i32 = arith.constant 1 : i32
    %20 = arith.addi %4, %c1_i32 : i32
    %21 = arith.index_cast %20 : i32 to index
    %c0_14 = arith.constant 0 : index
    %c0_15 = arith.constant 0 : index
    %22 = vector.load %arg9[%21, %c0_14, %c0_15] : memref<18x18x4xf32, #tpu.memory_space<vmem>>, vector<8x16x4xf32>
    %23 = arith.truncf %22 : vector<8x16x4xf32> to vector<8x16x4xbf16>
    %c0_16 = arith.constant 0 : index
    %c0_17 = arith.constant 0 : index
    %c12 = arith.constant 12 : index
    %24 = vector.load %arg10[%c0_16, %c0_17, %c12] : memref<8x16x36xbf16, #tpu.memory_space<vmem>>, vector<8x16x4xbf16>
    tpu.vector_store %arg10[%c0_16, %c0_17, %c12], %23 {strides = array<i32>} : memref<8x16x36xbf16, #tpu.memory_space<vmem>>, vector<8x16x4xbf16>,
    %c1_i32_18 = arith.constant 1 : i32
    %25 = arith.addi %4, %c1_i32_18 : i32
    %26 = arith.index_cast %25 : i32 to index
    %c1_19 = arith.constant 1 : index
    %c0_20 = arith.constant 0 : index
    %27 = vector.load %arg9[%26, %c1_19, %c0_20] : memref<18x18x4xf32, #tpu.memory_space<vmem>>, vector<8x16x4xf32>
    %28 = arith.truncf %27 : vector<8x16x4xf32> to vector<8x16x4xbf16>
    %c0_21 = arith.constant 0 : index
    %c0_22 = arith.constant 0 : index
    %c16 = arith.constant 16 : index
    %29 = vector.load %arg10[%c0_21, %c0_22, %c16] : memref<8x16x36xbf16, #tpu.memory_space<vmem>>, vector<8x16x4xbf16>
    tpu.vector_store %arg10[%c0_21, %c0_22, %c16], %28 {strides = array<i32>} : memref<8x16x36xbf16, #tpu.memory_space<vmem>>, vector<8x16x4xbf16>,
    %c1_i32_23 = arith.constant 1 : i32
    %30 = arith.addi %4, %c1_i32_23 : i32
    %31 = arith.index_cast %30 : i32 to index
    %c2_24 = arith.constant 2 : index
    %c0_25 = arith.constant 0 : index
    %32 = vector.load %arg9[%31, %c2_24, %c0_25] : memref<18x18x4xf32, #tpu.memory_space<vmem>>, vector<8x16x4xf32>
    %33 = arith.truncf %32 : vector<8x16x4xf32> to vector<8x16x4xbf16>
    %c0_26 = arith.constant 0 : index
    %c0_27 = arith.constant 0 : index
    %c20 = arith.constant 20 : index
    %34 = vector.load %arg10[%c0_26, %c0_27, %c20] : memref<8x16x36xbf16, #tpu.memory_space<vmem>>, vector<8x16x4xbf16>
    tpu.vector_store %arg10[%c0_26, %c0_27, %c20], %33 {strides = array<i32>} : memref<8x16x36xbf16, #tpu.memory_space<vmem>>, vector<8x16x4xbf16>,
    %c2_i32 = arith.constant 2 : i32
    %35 = arith.addi %4, %c2_i32 : i32
    %36 = arith.index_cast %35 : i32 to index
    %c0_28 = arith.constant 0 : index
    %c0_29 = arith.constant 0 : index
    %37 = vector.load %arg9[%36, %c0_28, %c0_29] : memref<18x18x4xf32, #tpu.memory_space<vmem>>, vector<8x16x4xf32>
    %38 = arith.truncf %37 : vector<8x16x4xf32> to vector<8x16x4xbf16>
    %c0_30 = arith.constant 0 : index
    %c0_31 = arith.constant 0 : index
    %c24 = arith.constant 24 : index
    %39 = vector.load %arg10[%c0_30, %c0_31, %c24] : memref<8x16x36xbf16, #tpu.memory_space<vmem>>, vector<8x16x4xbf16>
    tpu.vector_store %arg10[%c0_30, %c0_31, %c24], %38 {strides = array<i32>} : memref<8x16x36xbf16, #tpu.memory_space<vmem>>, vector<8x16x4xbf16>,
    %c2_i32_32 = arith.constant 2 : i32
    %40 = arith.addi %4, %c2_i32_32 : i32
    %41 = arith.index_cast %40 : i32 to index
    %c1_33 = arith.constant 1 : index
    %c0_34 = arith.constant 0 : index
    %42 = vector.load %arg9[%41, %c1_33, %c0_34] : memref<18x18x4xf32, #tpu.memory_space<vmem>>, vector<8x16x4xf32>
    %43 = arith.truncf %42 : vector<8x16x4xf32> to vector<8x16x4xbf16>
    %c0_35 = arith.constant 0 : index
    %c0_36 = arith.constant 0 : index
    %c28 = arith.constant 28 : index
    %44 = vector.load %arg10[%c0_35, %c0_36, %c28] : memref<8x16x36xbf16, #tpu.memory_space<vmem>>, vector<8x16x4xbf16>
    tpu.vector_store %arg10[%c0_35, %c0_36, %c28], %43 {strides = array<i32>} : memref<8x16x36xbf16, #tpu.memory_space<vmem>>, vector<8x16x4xbf16>,
    %c2_i32_37 = arith.constant 2 : i32
    %45 = arith.addi %4, %c2_i32_37 : i32
    %46 = arith.index_cast %45 : i32 to index
    %c2_38 = arith.constant 2 : index
    %c0_39 = arith.constant 0 : index
    %47 = vector.load %arg9[%46, %c2_38, %c0_39] : memref<18x18x4xf32, #tpu.memory_space<vmem>>, vector<8x16x4xf32>
    %48 = arith.truncf %47 : vector<8x16x4xf32> to vector<8x16x4xbf16>
    %c0_40 = arith.constant 0 : index
    %c0_41 = arith.constant 0 : index
    %c32 = arith.constant 32 : index
    %49 = vector.load %arg10[%c0_40, %c0_41, %c32] : memref<8x16x36xbf16, #tpu.memory_space<vmem>>, vector<8x16x4xbf16>
    tpu.vector_store %arg10[%c0_40, %c0_41, %c32], %48 {strides = array<i32>} : memref<8x16x36xbf16, #tpu.memory_space<vmem>>, vector<8x16x4xbf16>,
    %c0_42 = arith.constant 0 : index
    %c0_43 = arith.constant 0 : index
    %c0_44 = arith.constant 0 : index
    %50 = vector.load %arg10[%c0_42, %c0_43, %c0_44] : memref<8x16x36xbf16, #tpu.memory_space<vmem>>, vector<8x16x36xbf16>
    %51 = vector.shape_cast %50 : vector<8x16x36xbf16> to vector<128x36xbf16>
    %c0_45 = arith.constant 0 : index
    %c0_46 = arith.constant 0 : index
    %52 = vector.load %arg3[%c0_45, %c0_46] : memref<36x32xbf16, #tpu.memory_space<vmem>>, vector<36x32xbf16>
    %cst = arith.constant dense<0.000000e+00> : vector<128x32xf32>
    %53 = tpu.matmul %51, %52, %cst {dimension_numbers = #tpu.dot_dimension_numbers<[1], [0], [0], [1], [0, 0, 1, 1], [], []>} : vector<128x36xbf16>, vector<36x32xbf16>, vector<128x32xf32> -> vector<128x32xf32>
    %c0_47 = arith.constant 0 : index
    %c0_48 = arith.constant 0 : index
    %54 = vector.load %arg4[%c0_47, %c0_48] : memref<1x32xf32, #tpu.memory_space<vmem>>, vector<1x32xf32>
    %55 = vector.broadcast %54 : vector<1x32xf32> to vector<128x32xf32>
    %56 = arith.addf %53, %55 : vector<128x32xf32>
    %cst_49 = arith.constant 0.000000e+00 : f32
    %57 = vector.broadcast %cst_49 : f32 to vector<128x32xf32>
    %58 = arith.maximumf %56, %57 : vector<128x32xf32>
    %59 = arith.truncf %58 : vector<128x32xf32> to vector<128x32xbf16>
    %c0_50 = arith.constant 0 : index
    %c0_51 = arith.constant 0 : index
    %60 = vector.load %arg5[%c0_50, %c0_51] : memref<32x20xbf16, #tpu.memory_space<vmem>>, vector<32x20xbf16>
    %cst_52 = arith.constant dense<0.000000e+00> : vector<128x20xf32>
    %61 = tpu.matmul %59, %60, %cst_52 {dimension_numbers = #tpu.dot_dimension_numbers<[1], [0], [0], [1], [0, 0, 1, 1], [], []>} : vector<128x32xbf16>, vector<32x20xbf16>, vector<128x20xf32> -> vector<128x20xf32>
    %c0_53 = arith.constant 0 : index
    %c0_54 = arith.constant 0 : index
    %62 = vector.load %arg6[%c0_53, %c0_54] : memref<1x20xf32, #tpu.memory_space<vmem>>, vector<1x20xf32>
    %63 = vector.broadcast %62 : vector<1x20xf32> to vector<128x20xf32>
    %64 = arith.addf %61, %63 : vector<128x20xf32>
    %65 = vector.extract_strided_slice %64 {offsets = [0, 0], sizes = [128, 8], strides = [1, 1]} : vector<128x20xf32> to vector<128x8xf32>
    %66 = vector.shape_cast %65 : vector<128x8xf32> to vector<1x8x16x8xf32>
    %c0_55 = arith.constant 0 : index
    %c0_56 = arith.constant 0 : index
    %c0_57 = arith.constant 0 : index
    %c0_58 = arith.constant 0 : index
    %67 = vector.load %arg7[%c0_55, %c0_56, %c0_57, %c0_58] : memref<1x8x16x8xf32, #tpu.memory_space<vmem>>, vector<1x8x16x8xf32>
    tpu.vector_store %arg7[%c0_55, %c0_56, %c0_57, %c0_58], %66 {strides = array<i32>} : memref<1x8x16x8xf32, #tpu.memory_space<vmem>>, vector<1x8x16x8xf32>,
    %68 = vector.extract_strided_slice %64 {offsets = [0, 8], sizes = [128, 12], strides = [1, 1]} : vector<128x20xf32> to vector<128x12xf32>
    %69 = vector.shape_cast %68 : vector<128x12xf32> to vector<1x8x16x12xf32>
    %c0_59 = arith.constant 0 : index
    %c0_60 = arith.constant 0 : index
    %c0_61 = arith.constant 0 : index
    %c0_62 = arith.constant 0 : index
    %70 = vector.load %arg8[%c0_59, %c0_60, %c0_61, %c0_62] : memref<1x8x16x12xf32, #tpu.memory_space<vmem>>, vector<1x8x16x12xf32>
    tpu.vector_store %arg8[%c0_59, %c0_60, %c0_61, %c0_62], %69 {strides = array<i32>} : memref<1x8x16x12xf32, #tpu.memory_space<vmem>>, vector<1x8x16x12xf32>,
    return
  }
  func.func @transform_0(%arg0: i32, %arg1: i32) -> (i32, i32, i32, i32) {
    %c0_i32 = arith.constant 0 : i32
    %c0_i32_0 = arith.constant 0 : i32
    %c0_i32_1 = arith.constant 0 : i32
    %c0_i32_2 = arith.constant 0 : i32
    return %arg0, %c0_i32, %c0_i32_0, %c0_i32_1 : i32, i32, i32, i32
  }
  func.func @transform_1(%arg0: i32, %arg1: i32) -> (i32, i32) {
    %c0_i32 = arith.constant 0 : i32
    %c0_i32_0 = arith.constant 0 : i32
    %c0_i32_1 = arith.constant 0 : i32
    return %c0_i32, %c0_i32_0 : i32, i32
  }
  func.func @transform_2(%arg0: i32, %arg1: i32) -> (i32, i32) {
    %c0_i32 = arith.constant 0 : i32
    %c0_i32_0 = arith.constant 0 : i32
    %c0_i32_1 = arith.constant 0 : i32
    return %c0_i32, %c0_i32_0 : i32, i32
  }
  func.func @transform_3(%arg0: i32, %arg1: i32) -> (i32, i32) {
    %c0_i32 = arith.constant 0 : i32
    %c0_i32_0 = arith.constant 0 : i32
    %c0_i32_1 = arith.constant 0 : i32
    return %c0_i32, %c0_i32_0 : i32, i32
  }
  func.func @transform_4(%arg0: i32, %arg1: i32) -> (i32, i32) {
    %c0_i32 = arith.constant 0 : i32
    %c0_i32_0 = arith.constant 0 : i32
    %c0_i32_1 = arith.constant 0 : i32
    return %c0_i32, %c0_i32_0 : i32, i32
  }
  func.func @transform_5(%arg0: i32, %arg1: i32) -> (i32, i32, i32, i32) {
    %c0_i32 = arith.constant 0 : i32
    %c0_i32_0 = arith.constant 0 : i32
    %c0_i32_1 = arith.constant 0 : i32
    return %arg0, %arg1, %c0_i32, %c0_i32_0 : i32, i32, i32, i32
  }
  func.func @transform_6(%arg0: i32, %arg1: i32) -> (i32, i32, i32, i32) {
    %c0_i32 = arith.constant 0 : i32
    %c0_i32_0 = arith.constant 0 : i32
    %c0_i32_1 = arith.constant 0 : i32
    return %arg0, %arg1, %c0_i32, %c0_i32_0 : i32, i32, i32, i32
  }
}

</mosaic_0001>

<llo_original>
// kernel: tpu_custom_call.1
$region0: #{tpu_custom_call.1}
  #allocation0 [shape = 'u32[]', space=smem, size = 0x4, offset = 0x4, fixed_abs, tag = 'smem constant byte address 0x4 - core index']
  #allocation1 [shape = 'u32[144,128]{1,0:T(1,128)}', space=vmem, size = 0x12000, scoped, tag = 'internal scratch']
  #allocation2 [shape = 'f32[18,18,4]{2,1,0:T(8,128)}', space=vmem, size = 0x36000, scoped, tag = 'scratch operand']
  #allocation3 [shape = 'bf16[8,16,36]{2,1,0:T(16,128)(2,1)}', space=vmem, size = 0x8000, scoped, tag = 'scratch operand']
  %s0 = inlined_call_operand.vmem [shape: f32[2,16,16,4], index: 0, kind: input, shape index: {}]
  %s1 = inlined_call_operand.vmem [shape: bf16[36,32], index: 1, kind: input, shape index: {}]
  %s2 = inlined_call_operand.vmem [shape: f32[1,32], index: 2, kind: input, shape index: {}]
  %s3 = inlined_call_operand.vmem [shape: bf16[32,20], index: 3, kind: input, shape index: {}]
  %s4 = inlined_call_operand.vmem [shape: f32[1,20], index: 4, kind: input, shape index: {}]
  %s5 = inlined_call_operand.vmem [shape: f32[2,16,16,8], index: 5, kind: output, shape index: {0}]
  %s6 = inlined_call_operand.vmem [shape: f32[2,16,16,12], index: 6, kind: output, shape index: {1}]
  %7 = xla_tuple %s5, %s6
  %s8 = sld [smem:[#allocation0]]
  $region65: #{tpu_custom_call.1} parent=0
    _
  %s10 = ssub.s32 1, %s8
  %s11 = scalar_select 0, %s10, %s8
  loop: start=0, step=1, limit=6
  $region2: #{tpu_custom_call.1} parent=0 // loop_pre_header
    _
  $region3: #{tpu_custom_call.1} parent=0 // loop_header
    %s13 = sphi 0, %s17
    %p14 = scmp.ge.s32.totalorder %s13, 6
    %s20 = sphi 0, %s32
    %s21 = sphi 0, %s28
    %s22 = sphi 0, %s20
    %s23 = sphi 0, %s21
    %s24 = sphi 0, %s22
    %s25 = sphi 0, %s23
    %s35 = sphi 0, %s37
    %s38 = sphi 0, %s35
    %s39 = sphi 0, %s38
    %s55 = sphi 0, %s39
    %s59 = sphi 0, %s59
    %s61 = sphi 0, %s59
    %s62 = sphi 0, %s61
    %s76 = sphi 0, %s62
    %s80 = sphi 0, %s80
    %s82 = sphi 0, %s80
    %s83 = sphi 0, %s82
    %s97 = sphi 0, %s83
    %s101 = sphi 0, %s101
    %s103 = sphi 0, %s101
    %s104 = sphi 0, %s103
    %s118 = sphi 0, %s104
    %s122 = sphi 0, %s122
    %s124 = sphi 0, %s122
    %s125 = sphi 0, %s124
    %s139 = sphi 0, %s125
    %s147 = sphi 0, %s149
    %s150 = sphi 0, %s147
    %s151 = sphi 0, %s150
    %s167 = sphi 0, %s151
    %s175 = sphi 0, %s177
    %s178 = sphi 0, %s175
    %s179 = sphi 0, %s178
    %s195 = sphi 0, %s179
  $region4: #{tpu_custom_call.1} parent=0 // loop_header_branch
    %16 = sbr.rel (%p14) target = $region8
  $region5: #{tpu_custom_call.1} parent=0 // loop_body
    %s18 = ssub.s32 %s13, 1
    %s19 = ssub.s32 %s13, 2
    %s26 = sadd.s32 1, %s21
    %p27 = scmp.ge.s32.totalorder %s26, 2
    %s28 = scalar_select %p27, 0, %s26
    %s29 = sadd.s32 1, %s20
    %s30 = scalar_select %p27, %s29, %s20
    %p31 = scmp.ge.s32.totalorder %s30, 2
    %s32 = scalar_select %p31, 0, %s30
    %s33 = ssub.s32 %s20, %s32
    %p34 = scmp.eq.s32.totalorder %s33, 0
    %s36 = sadd.s32 %s35, 1
    %s37 = scalar_select %p34, %s35, %s36
    %p40 = pneg %p34
    %p41 = scmp.eq.s32.totalorder %s13, 3
    %p42 = por %p40, %p41
    %p43 = scmp.ne.s32.totalorder %s35, %s38
    %p44 = scmp.eq.s32.totalorder %s13, 0
    %p45 = por %p43, %p44
    %p46 = scmp.ne.s32.totalorder %s35, %s38
    %p47 = scmp.eq.s32.totalorder %s18, 3
    %p48 = por %p46, %p47
    %p49 = scmp.ne.s32.totalorder %s38, %s39
    %p50 = scmp.eq.s32.totalorder %s18, 0
    %p51 = por %p49, %p50
    %p52 = scmp.ne.s32.totalorder %s38, %s39
    %p53 = scmp.eq.s32.totalorder %s19, 3
    %p54 = por %p52, %p53
    %p56 = scmp.ne.s32.totalorder %s39, %s55
    %p57 = scmp.eq.s32.totalorder %s19, 0
    %p58 = por %p56, %p57
    %s60 = sadd.s32 %s59, 1
    %p63 = scmp.eq.s32.totalorder %s13, 3
    %p64 = scmp.ne.s32.totalorder %s59, %s61
    %p65 = scmp.eq.s32.totalorder %s13, 0
    %p66 = por %p64, %p65
    %p67 = scmp.ne.s32.totalorder %s59, %s61
    %p68 = scmp.eq.s32.totalorder %s18, 3
    %p69 = por %p67, %p68
    %p70 = scmp.ne.s32.totalorder %s61, %s62
    %p71 = scmp.eq.s32.totalorder %s18, 0
    %p72 = por %p70, %p71
    %p73 = scmp.ne.s32.totalorder %s61, %s62
    %p74 = scmp.eq.s32.totalorder %s19, 3
    %p75 = por %p73, %p74
    %p77 = scmp.ne.s32.totalorder %s62, %s76
    %p78 = scmp.eq.s32.totalorder %s19, 0
    %p79 = por %p77, %p78
    %s81 = sadd.s32 %s80, 1
    %p84 = scmp.eq.s32.totalorder %s13, 3
    %p85 = scmp.ne.s32.totalorder %s80, %s82
    %p86 = scmp.eq.s32.totalorder %s13, 0
    %p87 = por %p85, %p86
    %p88 = scmp.ne.s32.totalorder %s80, %s82
    %p89 = scmp.eq.s32.totalorder %s18, 3
    %p90 = por %p88, %p89
    %p91 = scmp.ne.s32.totalorder %s82, %s83
    %p92 = scmp.eq.s32.totalorder %s18, 0
    %p93 = por %p91, %p92
    %p94 = scmp.ne.s32.totalorder %s82, %s83
    %p95 = scmp.eq.s32.totalorder %s19, 3
    %p96 = por %p94, %p95
    %p98 = scmp.ne.s32.totalorder %s83, %s97
    %p99 = scmp.eq.s32.totalorder %s19, 0
    %p100 = por %p98, %p99
    %s102 = sadd.s32 %s101, 1
    %p105 = scmp.eq.s32.totalorder %s13, 3
    %p106 = scmp.ne.s32.totalorder %s101, %s103
    %p107 = scmp.eq.s32.totalorder %s13, 0
    %p108 = por %p106, %p107
    %p109 = scmp.ne.s32.totalorder %s101, %s103
    %p110 = scmp.eq.s32.totalorder %s18, 3
    %p111 = por %p109, %p110
    %p112 = scmp.ne.s32.totalorder %s103, %s104
    %p113 = scmp.eq.s32.totalorder %s18, 0
    %p114 = por %p112, %p113
    %p115 = scmp.ne.s32.totalorder %s103, %s104
    %p116 = scmp.eq.s32.totalorder %s19, 3
    %p117 = por %p115, %p116
    %p119 = scmp.ne.s32.totalorder %s104, %s118
    %p120 = scmp.eq.s32.totalorder %s19, 0
    %p121 = por %p119, %p120
    %s123 = sadd.s32 %s122, 1
    %p126 = scmp.eq.s32.totalorder %s13, 3
    %p127 = scmp.ne.s32.totalorder %s122, %s124
    %p128 = scmp.eq.s32.totalorder %s13, 0
    %p129 = por %p127, %p128
    %p130 = scmp.ne.s32.totalorder %s122, %s124
    %p131 = scmp.eq.s32.totalorder %s18, 3
    %p132 = por %p130, %p131
    %p133 = scmp.ne.s32.totalorder %s124, %s125
    %p134 = scmp.eq.s32.totalorder %s18, 0
    %p135 = por %p133, %p134
    %p136 = scmp.ne.s32.totalorder %s124, %s125
    %p137 = scmp.eq.s32.totalorder %s19, 3
    %p138 = por %p136, %p137
    %p140 = scmp.ne.s32.totalorder %s125, %s139
    %p141 = scmp.eq.s32.totalorder %s19, 0
    %p142 = por %p140, %p141
    %s143 = ssub.s32 %s20, %s32
    %s144 = ssub.s32 %s21, %s28
    %s145 = sor.u32 %s143, %s144
    %p146 = scmp.eq.s32.totalorder %s145, 0
    %s148 = sadd.s32 %s147, 1
    %s149 = scalar_select %p146, %s147, %s148
    %p152 = pneg %p146
    %p153 = scmp.eq.s32.totalorder %s13, 3
    %p154 = por %p152, %p153
    %p155 = scmp.ne.s32.totalorder %s147, %s150
    %p156 = scmp.eq.s32.totalorder %s13, 0
    %p157 = por %p155, %p156
    %p158 = scmp.ne.s32.totalorder %s147, %s150
    %p159 = scmp.eq.s32.totalorder %s18, 3
    %p160 = por %p158, %p159
    %p161 = scmp.ne.s32.totalorder %s150, %s151
    %p162 = scmp.eq.s32.totalorder %s18, 0
    %p163 = por %p161, %p162
    %p164 = scmp.ne.s32.totalorder %s150, %s151
    %p165 = scmp.eq.s32.totalorder %s19, 3
    %p166 = por %p164, %p165
    %p168 = scmp.ne.s32.totalorder %s151, %s167
    %p169 = scmp.eq.s32.totalorder %s19, 0
    %p170 = por %p168, %p169
    %s171 = ssub.s32 %s20, %s32
    %s172 = ssub.s32 %s21, %s28
    %s173 = sor.u32 %s171, %s172
    %p174 = scmp.eq.s32.totalorder %s173, 0
    %s176 = sadd.s32 %s175, 1
    %s177 = scalar_select %p174, %s175, %s176
    %p180 = pneg %p174
    %p181 = scmp.eq.s32.totalorder %s13, 3
    %p182 = por %p180, %p181
    %p183 = scmp.ne.s32.totalorder %s175, %s178
    %p184 = scmp.eq.s32.totalorder %s13, 0
    %p185 = por %p183, %p184
    %p186 = scmp.ne.s32.totalorder %s175, %s178
    %p187 = scmp.eq.s32.totalorder %s18, 3
    %p188 = por %p186, %p187
    %p189 = scmp.ne.s32.totalorder %s178, %s179
    %p190 = scmp.eq.s32.totalorder %s18, 0
    %p191 = por %p189, %p190
    %p192 = scmp.ne.s32.totalorder %s178, %s179
    %p193 = scmp.eq.s32.totalorder %s19, 3
    %p194 = por %p192, %p193
    %p196 = scmp.ne.s32.totalorder %s179, %s195
    %p197 = scmp.eq.s32.totalorder %s19, 0
    %p198 = por %p196, %p197
    %p199 = scmp.le.s32.totalorder 1, %s13
    %p200 = scmp.lt.s32.totalorder %s13, 5
    %p201 = pnand %p199, %p200
    %p202 = pneg %p201
    // Predicated region
    $region9: #{tpu_custom_call.1} parent=5 // pred_check
      _
    $region10: #{tpu_custom_call.1} parent=5 // pred_check_branch
      %204 = sbr.rel (%p201) target = $region12
    $region11: #{tpu_custom_call.1} parent=5 // pred_region
      %s205 = ssub.s32 %s13, 1
      // Predicated region
      $region13: #{tpu_custom_call.1} parent=11 // pred_check
        %p206 = pneg %p72
      $region14: #{tpu_custom_call.1} parent=11 // pred_check_branch
        %208 = sbr.rel (%p206) target = $region16
      $region15: #{tpu_custom_call.1} parent=11 // pred_region
        _
      $region16: #{tpu_custom_call.1} parent=11 // pred_fallthru
        _
      // Predicated region
      $region17: #{tpu_custom_call.1} parent=11 // pred_check
        %p209 = pneg %p93
      $region18: #{tpu_custom_call.1} parent=11 // pred_check_branch
        %211 = sbr.rel (%p209) target = $region20
      $region19: #{tpu_custom_call.1} parent=11 // pred_region
        _
      $region20: #{tpu_custom_call.1} parent=11 // pred_fallthru
        _
      // Predicated region
      $region21: #{tpu_custom_call.1} parent=11 // pred_check
        %p212 = pneg %p114
      $region22: #{tpu_custom_call.1} parent=11 // pred_check_branch
        %214 = sbr.rel (%p212) target = $region24
      $region23: #{tpu_custom_call.1} parent=11 // pred_region
        _
      $region24: #{tpu_custom_call.1} parent=11 // pred_fallthru
        _
      // Predicated region
      $region25: #{tpu_custom_call.1} parent=11 // pred_check
        %p215 = pneg %p135
      $region26: #{tpu_custom_call.1} parent=11 // pred_check_branch
        %217 = sbr.rel (%p215) target = $region28
      $region27: #{tpu_custom_call.1} parent=11 // pred_region
        _
      $region28: #{tpu_custom_call.1} parent=11 // pred_fallthru
        _
    $region12: #{tpu_custom_call.1} parent=5 // pred_fallthru
      _
    %p218 = scmp.lt.s32.totalorder %s13, 4
    // Predicated region
    $region29: #{tpu_custom_call.1} parent=5 // pred_check
      %p219 = pneg %p218
    $region30: #{tpu_custom_call.1} parent=5 // pred_check_branch
      %221 = sbr.rel (%p219) target = $region32
    $region31: #{tpu_custom_call.1} parent=5 // pred_region
      // Predicated region
      $region33: #{tpu_custom_call.1} parent=31 // pred_check
        %p222 = pneg %p45
      $region34: #{tpu_custom_call.1} parent=31 // pred_check_branch
        %224 = sbr.rel (%p222) target = $region36
      $region35: #{tpu_custom_call.1} parent=31 // pred_region
        %p225 = scmp.lt.s32.totalorder %s20, 1
        %s226 = scalar_select %p225, %s20, 1
        %s227 = smul.addr %s226, 32
        %s228 = smul.addr %s227, 8
        %s229 = scalar_lea.vmem %s0, %s228
      $region36: #{tpu_custom_call.1} parent=31 // pred_fallthru
        _
    $region32: #{tpu_custom_call.1} parent=5 // pred_fallthru
      _
    %p230 = scmp.le.s32.totalorder 1, %s13
    %p231 = scmp.lt.s32.totalorder %s13, 5
    %p232 = pnand %p230, %p231
    %p233 = pneg %p232
    // Predicated region
    $region37: #{tpu_custom_call.1} parent=5 // pred_check
      _
    $region38: #{tpu_custom_call.1} parent=5 // pred_check_branch
      %235 = sbr.rel (%p232) target = $region40
    $region39: #{tpu_custom_call.1} parent=5 // pred_region
      %s236 = ssub.s32 %s13, 1
      %p237 = scmp.lt.s32.totalorder %s22, 1
      %s238 = scalar_select %p237, %s22, 1
      %s239 = smul.addr %s238, 32
      %s240 = smul.addr %s239, 8
      %s241 = scalar_lea.vmem %s0, %s240
      %p242 = pneg %p51
      %p243 = pneg %p48
      %p244 = pneg %p72
      %p245 = pneg %p69
      %p246 = pneg %p93
      %p247 = pneg %p90
      %p248 = pneg %p114
      %p249 = pneg %p111
      %p250 = pneg %p135
      %p251 = pneg %p132
      %p252 = pneg %p163
      %p253 = pneg %p160
      %s254 = smul.u32 8, %s23
      %p255 = scmp.lt.s32.totalorder %s22, 1
      %s256 = scalar_select %p255, %s22, 1
      %p257 = scmp.lt.s32.totalorder %s254, 15
      %s258 = scalar_select %p257, %s254, 15
      %s259 = smul.addr %s258, 2
      %s260 = smul.addr %s256, 32
      %s261 = sadd.s32 %s259, %s260
      %s262 = smul.addr %s261, 8
      %s263 = scalar_lea.vmem %s5, %s262
      %p264 = pneg %p191
      %p265 = pneg %p188
      %s266 = smul.u32 8, %s23
      %p267 = scmp.lt.s32.totalorder %s22, 1
      %s268 = scalar_select %p267, %s22, 1
      %p269 = scmp.lt.s32.totalorder %s266, 15
      %s270 = scalar_select %p269, %s266, 15
      %s271 = smul.addr %s270, 2
      %s272 = smul.addr %s268, 32
      %s273 = sadd.s32 %s271, %s272
      %s274 = smul.addr %s273, 8
      %s275 = scalar_lea.vmem %s6, %s274
      %p276 = scmp.lt.s32.totalorder %s22, 1
      %s277 = scalar_select %p276, %s22, 1
      %s278 = smul.addr %s277, 32
      %s279 = smul.addr %s278, 8
      %s280 = scalar_lea.vmem %s0, %s279
      %s281 = smul.u32 8, %s23
      %p282 = scmp.lt.s32.totalorder %s22, 1
      %s283 = scalar_select %p282, %s22, 1
      %p284 = scmp.lt.s32.totalorder %s281, 15
      %s285 = scalar_select %p284, %s281, 15
      %s286 = smul.addr %s285, 2
      %s287 = smul.addr %s283, 32
      %s288 = sadd.s32 %s286, %s287
      %s289 = smul.addr %s288, 8
      %s290 = scalar_lea.vmem %s5, %s289
      %s291 = smul.u32 8, %s23
      %s292 = smul.u32 8, %s23
      %p293 = scmp.lt.s32.totalorder %s22, 1
      %s294 = scalar_select %p293, %s22, 1
      %p295 = scmp.lt.s32.totalorder %s292, 15
      %s296 = scalar_select %p295, %s292, 15
      %s297 = smul.addr %s296, 2
      %s298 = smul.addr %s294, 32
      %s299 = sadd.s32 %s297, %s298
      %s300 = smul.addr %s299, 8
      %s301 = scalar_lea.vmem %s6, %s300
      %s302 = smul.u32 8, %s23
      %p304 = scmp.eq.s32.totalorder %s23, 0
      // Predicated region
      $region41: #{tpu_custom_call.1} parent=39 // pred_check
        %p305 = pneg %p304
      $region42: #{tpu_custom_call.1} parent=39 // pred_check_branch
        %307 = sbr.rel (%p305) target = $region44
      $region43: #{tpu_custom_call.1} parent=39 // pred_region
        %vm308 = vcmask 31744
        %309 = vst.msk [vmem:[#allocation2] sm:$0xff] %vm308, 0.0
        %310 = vst.msk [vmem:[#allocation2 + $0x8] sm:$0xff] %vm308, 0.0
        %vm311 = vcmask 25600
        %312 = vst.msk [vmem:[#allocation2 + $0x10] sm:$0x3] %vm311, 0.0
        %313 = vst.msk [vmem:[#allocation2 + $0x18] sm:$0xff] %vm308, 0.0
        %314 = vst.msk [vmem:[#allocation2 + $0x20] sm:$0xff] %vm308, 0.0
        %315 = vst.msk [vmem:[#allocation2 + $0x28] sm:$0x3] %vm311, 0.0
        %316 = vst.msk [vmem:[#allocation2 + $0x30] sm:$0xff] %vm308, 0.0
        %317 = vst.msk [vmem:[#allocation2 + $0x38] sm:$0xff] %vm308, 0.0
        %318 = vst.msk [vmem:[#allocation2 + $0x40] sm:$0x3] %vm311, 0.0
        %319 = vst.msk [vmem:[#allocation2 + $0x48] sm:$0xff] %vm308, 0.0
        %320 = vst.msk [vmem:[#allocation2 + $0x50] sm:$0xff] %vm308, 0.0
        %321 = vst.msk [vmem:[#allocation2 + $0x58] sm:$0x3] %vm311, 0.0
        %322 = vst.msk [vmem:[#allocation2 + $0x60] sm:$0xff] %vm308, 0.0
        %323 = vst.msk [vmem:[#allocation2 + $0x68] sm:$0xff] %vm308, 0.0
        %324 = vst.msk [vmem:[#allocation2 + $0x70] sm:$0x3] %vm311, 0.0
        %325 = vst.msk [vmem:[#allocation2 + $0x78] sm:$0xff] %vm308, 0.0
        %326 = vst.msk [vmem:[#allocation2 + $0x80] sm:$0xff] %vm308, 0.0
        %327 = vst.msk [vmem:[#allocation2 + $0x88] sm:$0x3] %vm311, 0.0
        %328 = vst.msk [vmem:[#allocation2 + $0x90] sm:$0xff] %vm308, 0.0
        %329 = vst.msk [vmem:[#allocation2 + $0x98] sm:$0xff] %vm308, 0.0
        %330 = vst.msk [vmem:[#allocation2 + $0xa0] sm:$0x3] %vm311, 0.0
        %331 = vst.msk [vmem:[#allocation2 + $0xa8] sm:$0xff] %vm308, 0.0
        %332 = vst.msk [vmem:[#allocation2 + $0xb0] sm:$0xff] %vm308, 0.0
        %333 = vst.msk [vmem:[#allocation2 + $0xb8] sm:$0x3] %vm311, 0.0
        %334 = vst.msk [vmem:[#allocation2 + $0xc0] sm:$0xff] %vm308, 0.0
        %335 = vst.msk [vmem:[#allocation2 + $0xc8] sm:$0xff] %vm308, 0.0
        %336 = vst.msk [vmem:[#allocation2 + $0xd0] sm:$0x3] %vm311, 0.0
        %337 = vst.msk [vmem:[#allocation2 + $0xd8] sm:$0xff] %vm308, 0.0
        %338 = vst.msk [vmem:[#allocation2 + $0xe0] sm:$0xff] %vm308, 0.0
        %339 = vst.msk [vmem:[#allocation2 + $0xe8] sm:$0x3] %vm311, 0.0
        %340 = vst.msk [vmem:[#allocation2 + $0xf0] sm:$0xff] %vm308, 0.0
        %341 = vst.msk [vmem:[#allocation2 + $0xf8] sm:$0xff] %vm308, 0.0
        %342 = vst.msk [vmem:[#allocation2 + $0x100] sm:$0x3] %vm311, 0.0
        %343 = vst.msk [vmem:[#allocation2 + $0x108] sm:$0xff] %vm308, 0.0
        %344 = vst.msk [vmem:[#allocation2 + $0x110] sm:$0xff] %vm308, 0.0
        %345 = vst.msk [vmem:[#allocation2 + $0x118] sm:$0x3] %vm311, 0.0
        %346 = vst.msk [vmem:[#allocation2 + $0x120] sm:$0xff] %vm308, 0.0
        %347 = vst.msk [vmem:[#allocation2 + $0x128] sm:$0xff] %vm308, 0.0
        %348 = vst.msk [vmem:[#allocation2 + $0x130] sm:$0x3] %vm311, 0.0
        %349 = vst.msk [vmem:[#allocation2 + $0x138] sm:$0xff] %vm308, 0.0
        %350 = vst.msk [vmem:[#allocation2 + $0x140] sm:$0xff] %vm308, 0.0
        %351 = vst.msk [vmem:[#allocation2 + $0x148] sm:$0x3] %vm311, 0.0
        %352 = vst.msk [vmem:[#allocation2 + $0x150] sm:$0xff] %vm308, 0.0
        %353 = vst.msk [vmem:[#allocation2 + $0x158] sm:$0xff] %vm308, 0.0
        %354 = vst.msk [vmem:[#allocation2 + $0x160] sm:$0x3] %vm311, 0.0
        %355 = vst.msk [vmem:[#allocation2 + $0x168] sm:$0xff] %vm308, 0.0
        %356 = vst.msk [vmem:[#allocation2 + $0x170] sm:$0xff] %vm308, 0.0
        %357 = vst.msk [vmem:[#allocation2 + $0x178] sm:$0x3] %vm311, 0.0
        %358 = vst.msk [vmem:[#allocation2 + $0x180] sm:$0xff] %vm308, 0.0
        %359 = vst.msk [vmem:[#allocation2 + $0x188] sm:$0xff] %vm308, 0.0
        %360 = vst.msk [vmem:[#allocation2 + $0x190] sm:$0x3] %vm311, 0.0
        %361 = vst.msk [vmem:[#allocation2 + $0x198] sm:$0xff] %vm308, 0.0
        %362 = vst.msk [vmem:[#allocation2 + $0x1a0] sm:$0xff] %vm308, 0.0
        %363 = vst.msk [vmem:[#allocation2 + $0x1a8] sm:$0x3] %vm311, 0.0
        %v364 = vld [vmem:[%s280] sm:$0xff]
        %v365 = vld [vmem:[%s280 + $0x8] sm:$0xff]
        %v366 = vld [vmem:[%s280 + $0x10] sm:$0xff]
        %v367 = vld [vmem:[%s280 + $0x18] sm:$0xff]
        %v368 = vld [vmem:[%s280 + $0x20] sm:$0xff]
        %v369 = vld [vmem:[%s280 + $0x28] sm:$0xff]
        %v370 = vld [vmem:[%s280 + $0x30] sm:$0xff]
        %v371 = vld [vmem:[%s280 + $0x38] sm:$0xff]
        %v372 = vld [vmem:[%s280 + $0x40] sm:$0xff]
        %v373 = vld [vmem:[%s280 + $0x48] sm:$0xff]
        %v374 = vld [vmem:[%s280 + $0x50] sm:$0xff]
        %v375 = vld [vmem:[%s280 + $0x58] sm:$0xff]
        %v376 = vld [vmem:[%s280 + $0x60] sm:$0xff]
        %v377 = vld [vmem:[%s280 + $0x68] sm:$0xff]
        %v378 = vld [vmem:[%s280 + $0x70] sm:$0xff]
        %v379 = vld [vmem:[%s280 + $0x78] sm:$0xff]
        %v380 = vld [vmem:[%s280 + $0x80] sm:$0xff]
        %v381 = vld [vmem:[%s280 + $0x88] sm:$0xff]
        %v382 = vld [vmem:[%s280 + $0x90] sm:$0xff]
        %v383 = vld [vmem:[%s280 + $0x98] sm:$0xff]
        %v384 = vld [vmem:[%s280 + $0xa0] sm:$0xff]
        %v385 = vld [vmem:[%s280 + $0xa8] sm:$0xff]
        %v386 = vld [vmem:[%s280 + $0xb0] sm:$0xff]
        %v387 = vld [vmem:[%s280 + $0xb8] sm:$0xff]
        %v388 = vld [vmem:[%s280 + $0xc0] sm:$0xff]
        %v389 = vld [vmem:[%s280 + $0xc8] sm:$0xff]
        %v390 = vld [vmem:[%s280 + $0xd0] sm:$0xff]
        %v391 = vld [vmem:[%s280 + $0xd8] sm:$0xff]
        %v392 = vld [vmem:[%s280 + $0xe0] sm:$0xff]
        %v393 = vld [vmem:[%s280 + $0xe8] sm:$0xff]
        %v394 = vld [vmem:[%s280 + $0xf0] sm:$0xff]
        %v395 = vld [vmem:[%s280 + $0xf8] sm:$0xff]
        %s396 = scalar_lea.vmem [#allocation2], 24
        %397 = vst.msk [vmem:[%s396 + $0x1] sm:$0xff] %vm308, %v364
        %398 = vst.msk [vmem:[%s396 + $0x9] sm:$0xff] %vm308, %v365
        %399 = vst.msk [vmem:[%s396 + $0x19] sm:$0xff] %vm308, %v366
        %400 = vst.msk [vmem:[%s396 + $0x21] sm:$0xff] %vm308, %v367
        %401 = vst.msk [vmem:[%s396 + $0x31] sm:$0xff] %vm308, %v368
        %402 = vst.msk [vmem:[%s396 + $0x39] sm:$0xff] %vm308, %v369
        %403 = vst.msk [vmem:[%s396 + $0x49] sm:$0xff] %vm308, %v370
        %404 = vst.msk [vmem:[%s396 + $0x51] sm:$0xff] %vm308, %v371
        %405 = vst.msk [vmem:[%s396 + $0x61] sm:$0xff] %vm308, %v372
        %406 = vst.msk [vmem:[%s396 + $0x69] sm:$0xff] %vm308, %v373
        %407 = vst.msk [vmem:[%s396 + $0x79] sm:$0xff] %vm308, %v374
        %408 = vst.msk [vmem:[%s396 + $0x81] sm:$0xff] %vm308, %v375
        %409 = vst.msk [vmem:[%s396 + $0x91] sm:$0xff] %vm308, %v376
        %410 = vst.msk [vmem:[%s396 + $0x99] sm:$0xff] %vm308, %v377
        %411 = vst.msk [vmem:[%s396 + $0xa9] sm:$0xff] %vm308, %v378
        %412 = vst.msk [vmem:[%s396 + $0xb1] sm:$0xff] %vm308, %v379
        %413 = vst.msk [vmem:[%s396 + $0xc1] sm:$0xff] %vm308, %v380
        %414 = vst.msk [vmem:[%s396 + $0xc9] sm:$0xff] %vm308, %v381
        %415 = vst.msk [vmem:[%s396 + $0xd9] sm:$0xff] %vm308, %v382
        %416 = vst.msk [vmem:[%s396 + $0xe1] sm:$0xff] %vm308, %v383
        %417 = vst.msk [vmem:[%s396 + $0xf1] sm:$0xff] %vm308, %v384
        %418 = vst.msk [vmem:[%s396 + $0xf9] sm:$0xff] %vm308, %v385
        %419 = vst.msk [vmem:[%s396 + $0x109] sm:$0xff] %vm308, %v386
        %420 = vst.msk [vmem:[%s396 + $0x111] sm:$0xff] %vm308, %v387
        %421 = vst.msk [vmem:[%s396 + $0x121] sm:$0xff] %vm308, %v388
        %422 = vst.msk [vmem:[%s396 + $0x129] sm:$0xff] %vm308, %v389
        %423 = vst.msk [vmem:[%s396 + $0x139] sm:$0xff] %vm308, %v390
        %424 = vst.msk [vmem:[%s396 + $0x141] sm:$0xff] %vm308, %v391
        %425 = vst.msk [vmem:[%s396 + $0x151] sm:$0xff] %vm308, %v392
        %426 = vst.msk [vmem:[%s396 + $0x159] sm:$0xff] %vm308, %v393
        %427 = vst.msk [vmem:[%s396 + $0x169] sm:$0xff] %vm308, %v394
        %428 = vst.msk [vmem:[%s396 + $0x171] sm:$0xff] %vm308, %v395
      $region44: #{tpu_custom_call.1} parent=39 // pred_fallthru
        _
      %s429 = smul.u32 %s23, 8
      %s430 = smul.u32 %s429, 24
      %s431 = scalar_lea.vmem [#allocation2], %s430
      %v432 = vld [vmem:[%s431] sm:$0xff]
      %v433 = vld [vmem:[%s431 + $0x8] sm:$0xff]
      %v434 = vld [vmem:[%s431 + $0x18] sm:$0xff]
      %v435 = vld [vmem:[%s431 + $0x20] sm:$0xff]
      %v436 = vld [vmem:[%s431 + $0x30] sm:$0xff]
      %v437 = vld [vmem:[%s431 + $0x38] sm:$0xff]
      %v438 = vld [vmem:[%s431 + $0x48] sm:$0xff]
      %v439 = vld [vmem:[%s431 + $0x50] sm:$0xff]
      %v440 = vld [vmem:[%s431 + $0x60] sm:$0xff]
      %v441 = vld [vmem:[%s431 + $0x68] sm:$0xff]
      %v442 = vld [vmem:[%s431 + $0x78] sm:$0xff]
      %v443 = vld [vmem:[%s431 + $0x80] sm:$0xff]
      %v444 = vld [vmem:[%s431 + $0x90] sm:$0xff]
      %v445 = vld [vmem:[%s431 + $0x98] sm:$0xff]
      %v446 = vld [vmem:[%s431 + $0xa8] sm:$0xff]
      %v447 = vld [vmem:[%s431 + $0xb0] sm:$0xff]
      %v448 = vpack.c.bf16 %v433, %v432
      %v449 = vpack.c.bf16 %v435, %v434
      %v450 = vpack.c.bf16 %v437, %v436
      %v451 = vpack.c.bf16 %v439, %v438
      %v452 = vpack.c.bf16 %v441, %v440
      %v453 = vpack.c.bf16 %v443, %v442
      %v454 = vpack.c.bf16 %v445, %v444
      %v455 = vpack.c.bf16 %v447, %v446
      %vm456 = vcmask 31744
      %457 = vst.msk [vmem:[#allocation3] sm:$0xff] %vm456, %v448
      %458 = vst.msk [vmem:[#allocation3 + $0x8] sm:$0xff] %vm456, %v449
      %459 = vst.msk [vmem:[#allocation3 + $0x10] sm:$0xff] %vm456, %v450
      %460 = vst.msk [vmem:[#allocation3 + $0x18] sm:$0xff] %vm456, %v451
      %461 = vst.msk [vmem:[#allocation3 + $0x20] sm:$0xff] %vm456, %v452
      %462 = vst.msk [vmem:[#allocation3 + $0x28] sm:$0xff] %vm456, %v453
      %463 = vst.msk [vmem:[#allocation3 + $0x30] sm:$0xff] %vm456, %v454
      %464 = vst.msk [vmem:[#allocation3 + $0x38] sm:$0xff] %vm456, %v455
      %v465 = vld [vmem:[%s431 + $0x1] sm:$0xff]
      %v466 = vld [vmem:[%s431 + $0x9] sm:$0xff]
      %v467 = vld [vmem:[%s431 + $0x19] sm:$0xff]
      %v468 = vld [vmem:[%s431 + $0x21] sm:$0xff]
      %v469 = vld [vmem:[%s431 + $0x31] sm:$0xff]
      %v470 = vld [vmem:[%s431 + $0x39] sm:$0xff]
      %v471 = vld [vmem:[%s431 + $0x49] sm:$0xff]
      %v472 = vld [vmem:[%s431 + $0x51] sm:$0xff]
      %v473 = vld [vmem:[%s431 + $0x61] sm:$0xff]
      %v474 = vld [vmem:[%s431 + $0x69] sm:$0xff]
      %v475 = vld [vmem:[%s431 + $0x79] sm:$0xff]
      %v476 = vld [vmem:[%s431 + $0x81] sm:$0xff]
      %v477 = vld [vmem:[%s431 + $0x91] sm:$0xff]
      %v478 = vld [vmem:[%s431 + $0x99] sm:$0xff]
      %v479 = vld [vmem:[%s431 + $0xa9] sm:$0xff]
      %v480 = vld [vmem:[%s431 + $0xb1] sm:$0xff]
      %v481 = vpack.c.bf16 %v466, %v465
      %v482 = vpack.c.bf16 %v468, %v467
      %v483 = vpack.c.bf16 %v470, %v469
      %v484 = vpack.c.bf16 %v472, %v471
      %v485 = vpack.c.bf16 %v474, %v473
      %v486 = vpack.c.bf16 %v476, %v475
      %v487 = vpack.c.bf16 %v478, %v477
      %v488 = vpack.c.bf16 %v480, %v479
      %497 = vrot.lane.b32.xlu0 %v481, 4
      %v498 = vpop.permute.xlu0 %497
      %499 = vrot.lane.b32.xlu0 %v482, 4
      %v500 = vpop.permute.xlu0 %499
      %501 = vrot.lane.b32.xlu0 %v483, 4
      %v502 = vpop.permute.xlu0 %501
      %503 = vrot.lane.b32.xlu0 %v484, 4
      %v504 = vpop.permute.xlu0 %503
      %505 = vrot.lane.b32.xlu0 %v485, 4
      %v506 = vpop.permute.xlu0 %505
      %507 = vrot.lane.b32.xlu0 %v486, 4
      %v508 = vpop.permute.xlu0 %507
      %509 = vrot.lane.b32.xlu0 %v487, 4
      %v510 = vpop.permute.xlu0 %509
      %511 = vrot.lane.b32.xlu0 %v488, 4
      %v512 = vpop.permute.xlu0 %511
      %vm521 = vcmask 64544
      %522 = vst.msk [vmem:[#allocation3] sm:$0xff] %vm521, %v498
      %523 = vst.msk [vmem:[#allocation3 + $0x8] sm:$0xff] %vm521, %v500
      %524 = vst.msk [vmem:[#allocation3 + $0x10] sm:$0xff] %vm521, %v502
      %525 = vst.msk [vmem:[#allocation3 + $0x18] sm:$0xff] %vm521, %v504
      %526 = vst.msk [vmem:[#allocation3 + $0x20] sm:$0xff] %vm521, %v506
      %527 = vst.msk [vmem:[#allocation3 + $0x28] sm:$0xff] %vm521, %v508
      %528 = vst.msk [vmem:[#allocation3 + $0x30] sm:$0xff] %vm521, %v510
      %529 = vst.msk [vmem:[#allocation3 + $0x38] sm:$0xff] %vm521, %v512
      %v530 = vld [vmem:[%s431 + $0x2] sm:$0xff]
      %v531 = vld [vmem:[%s431 + $0xa] sm:$0xff]
      %v532 = vld [vmem:[%s431 + $0x1a] sm:$0xff]
      %v533 = vld [vmem:[%s431 + $0x22] sm:$0xff]
      %v534 = vld [vmem:[%s431 + $0x32] sm:$0xff]
      %v535 = vld [vmem:[%s431 + $0x3a] sm:$0xff]
      %v536 = vld [vmem:[%s431 + $0x4a] sm:$0xff]
      %v537 = vld [vmem:[%s431 + $0x52] sm:$0xff]
      %v538 = vld [vmem:[%s431 + $0x62] sm:$0xff]
      %v539 = vld [vmem:[%s431 + $0x6a] sm:$0xff]
      %v540 = vld [vmem:[%s431 + $0x7a] sm:$0xff]
      %v541 = vld [vmem:[%s431 + $0x82] sm:$0xff]
      %v542 = vld [vmem:[%s431 + $0x92] sm:$0xff]
      %v543 = vld [vmem:[%s431 + $0x9a] sm:$0xff]
      %v544 = vld [vmem:[%s431 + $0xaa] sm:$0xff]
      %v545 = vld [vmem:[%s431 + $0xb2] sm:$0xff]
      %v546 = vpack.c.bf16 %v531, %v530
      %v547 = vpack.c.bf16 %v533, %v532
      %v548 = vpack.c.bf16 %v535, %v534
      %v549 = vpack.c.bf16 %v537, %v536
      %v550 = vpack.c.bf16 %v539, %v538
      %v551 = vpack.c.bf16 %v541, %v540
      %v552 = vpack.c.bf16 %v543, %v542
      %v553 = vpack.c.bf16 %v545, %v544
      %562 = vrot.lane.b32.xlu0 %v546, 8
      %v563 = vpop.permute.xlu0 %562
      %564 = vrot.lane.b32.xlu0 %v547, 8
      %v565 = vpop.permute.xlu0 %564
      %566 = vrot.lane.b32.xlu0 %v548, 8
      %v567 = vpop.permute.xlu0 %566
      %568 = vrot.lane.b32.xlu0 %v549, 8
      %v569 = vpop.permute.xlu0 %568
      %570 = vrot.lane.b32.xlu0 %v550, 8
      %v571 = vpop.permute.xlu0 %570
      %572 = vrot.lane.b32.xlu0 %v551, 8
      %v573 = vpop.permute.xlu0 %572
      %574 = vrot.lane.b32.xlu0 %v552, 8
      %v575 = vpop.permute.xlu0 %574
      %576 = vrot.lane.b32.xlu0 %v553, 8
      %v577 = vpop.permute.xlu0 %576
      %vm586 = vcmask 97344
      %587 = vst.msk [vmem:[#allocation3] sm:$0xff] %vm586, %v563
      %588 = vst.msk [vmem:[#allocation3 + $0x8] sm:$0xff] %vm586, %v565
      %589 = vst.msk [vmem:[#allocation3 + $0x10] sm:$0xff] %vm586, %v567
      %590 = vst.msk [vmem:[#allocation3 + $0x18] sm:$0xff] %vm586, %v569
      %591 = vst.msk [vmem:[#allocation3 + $0x20] sm:$0xff] %vm586, %v571
      %592 = vst.msk [vmem:[#allocation3 + $0x28] sm:$0xff] %vm586, %v573
      %593 = vst.msk [vmem:[#allocation3 + $0x30] sm:$0xff] %vm586, %v575
      %594 = vst.msk [vmem:[#allocation3 + $0x38] sm:$0xff] %vm586, %v577
      %s595 = sadd.s32 %s429, 1
      %s596 = smul.u32 %s595, 24
      %s597 = scalar_lea.vmem [#allocation2], %s596
      %v598 = vld [vmem:[%s597] sm:$0xff]
      %v599 = vld [vmem:[%s597 + $0x8] sm:$0xff]
      %v600 = vld [vmem:[%s597 + $0x18] sm:$0xff]
      %v601 = vld [vmem:[%s597 + $0x20] sm:$0xff]
      %v602 = vld [vmem:[%s597 + $0x30] sm:$0xff]
      %v603 = vld [vmem:[%s597 + $0x38] sm:$0xff]
      %v604 = vld [vmem:[%s597 + $0x48] sm:$0xff]
      %v605 = vld [vmem:[%s597 + $0x50] sm:$0xff]
      %v606 = vld [vmem:[%s597 + $0x60] sm:$0xff]
      %v607 = vld [vmem:[%s597 + $0x68] sm:$0xff]
      %v608 = vld [vmem:[%s597 + $0x78] sm:$0xff]
      %v609 = vld [vmem:[%s597 + $0x80] sm:$0xff]
      %v610 = vld [vmem:[%s597 + $0x90] sm:$0xff]
      %v611 = vld [vmem:[%s597 + $0x98] sm:$0xff]
      %v612 = vld [vmem:[%s597 + $0xa8] sm:$0xff]
      %v613 = vld [vmem:[%s597 + $0xb0] sm:$0xff]
      %v614 = vpack.c.bf16 %v599, %v598
      %v615 = vpack.c.bf16 %v601, %v600
      %v616 = vpack.c.bf16 %v603, %v602
      %v617 = vpack.c.bf16 %v605, %v604
      %v618 = vpack.c.bf16 %v607, %v606
      %v619 = vpack.c.bf16 %v609, %v608
      %v620 = vpack.c.bf16 %v611, %v610
      %v621 = vpack.c.bf16 %v613, %v612
      %630 = vrot.lane.b32.xlu0 %v614, 12
      %v631 = vpop.permute.xlu0 %630
      %632 = vrot.lane.b32.xlu0 %v615, 12
      %v633 = vpop.permute.xlu0 %632
      %634 = vrot.lane.b32.xlu0 %v616, 12
      %v635 = vpop.permute.xlu0 %634
      %636 = vrot.lane.b32.xlu0 %v617, 12
      %v637 = vpop.permute.xlu0 %636
      %638 = vrot.lane.b32.xlu0 %v618, 12
      %v639 = vpop.permute.xlu0 %638
      %640 = vrot.lane.b32.xlu0 %v619, 12
      %v641 = vpop.permute.xlu0 %640
      %642 = vrot.lane.b32.xlu0 %v620, 12
      %v643 = vpop.permute.xlu0 %642
      %644 = vrot.lane.b32.xlu0 %v621, 12
      %v645 = vpop.permute.xlu0 %644
      %vm654 = vcmask 130144
      %655 = vst.msk [vmem:[#allocation3] sm:$0xff] %vm654, %v631
      %656 = vst.msk [vmem:[#allocation3 + $0x8] sm:$0xff] %vm654, %v633
      %657 = vst.msk [vmem:[#allocation3 + $0x10] sm:$0xff] %vm654, %v635
      %658 = vst.msk [vmem:[#allocation3 + $0x18] sm:$0xff] %vm654, %v637
      %659 = vst.msk [vmem:[#allocation3 + $0x20] sm:$0xff] %vm654, %v639
      %660 = vst.msk [vmem:[#allocation3 + $0x28] sm:$0xff] %vm654, %v641
      %661 = vst.msk [vmem:[#allocation3 + $0x30] sm:$0xff] %vm654, %v643
      %662 = vst.msk [vmem:[#allocation3 + $0x38] sm:$0xff] %vm654, %v645
      %v663 = vld [vmem:[%s597 + $0x1] sm:$0xff]
      %v664 = vld [vmem:[%s597 + $0x9] sm:$0xff]
      %v665 = vld [vmem:[%s597 + $0x19] sm:$0xff]
      %v666 = vld [vmem:[%s597 + $0x21] sm:$0xff]
      %v667 = vld [vmem:[%s597 + $0x31] sm:$0xff]
      %v668 = vld [vmem:[%s597 + $0x39] sm:$0xff]
      %v669 = vld [vmem:[%s597 + $0x49] sm:$0xff]
      %v670 = vld [vmem:[%s597 + $0x51] sm:$0xff]
      %v671 = vld [vmem:[%s597 + $0x61] sm:$0xff]
      %v672 = vld [vmem:[%s597 + $0x69] sm:$0xff]
      %v673 = vld [vmem:[%s597 + $0x79] sm:$0xff]
      %v674 = vld [vmem:[%s597 + $0x81] sm:$0xff]
      %v675 = vld [vmem:[%s597 + $0x91] sm:$0xff]
      %v676 = vld [vmem:[%s597 + $0x99] sm:$0xff]
      %v677 = vld [vmem:[%s597 + $0xa9] sm:$0xff]
      %v678 = vld [vmem:[%s597 + $0xb1] sm:$0xff]
      %v679 = vpack.c.bf16 %v664, %v663
      %v680 = vpack.c.bf16 %v666, %v665
      %v681 = vpack.c.bf16 %v668, %v667
      %v682 = vpack.c.bf16 %v670, %v669
      %v683 = vpack.c.bf16 %v672, %v671
      %v684 = vpack.c.bf16 %v674, %v673
      %v685 = vpack.c.bf16 %v676, %v675
      %v686 = vpack.c.bf16 %v678, %v677
      %695 = vrot.lane.b32.xlu0 %v679, 16
      %v696 = vpop.permute.xlu0 %695
      %697 = vrot.lane.b32.xlu0 %v680, 16
      %v698 = vpop.permute.xlu0 %697
      %699 = vrot.lane.b32.xlu0 %v681, 16
      %v700 = vpop.permute.xlu0 %699
      %701 = vrot.lane.b32.xlu0 %v682, 16
      %v702 = vpop.permute.xlu0 %701
      %703 = vrot.lane.b32.xlu0 %v683, 16
      %v704 = vpop.permute.xlu0 %703
      %705 = vrot.lane.b32.xlu0 %v684, 16
      %v706 = vpop.permute.xlu0 %705
      %707 = vrot.lane.b32.xlu0 %v685, 16
      %v708 = vpop.permute.xlu0 %707
      %709 = vrot.lane.b32.xlu0 %v686, 16
      %v710 = vpop.permute.xlu0 %709
      %vm719 = vcmask 162944
      %720 = vst.msk [vmem:[#allocation3] sm:$0xff] %vm719, %v696
      %721 = vst.msk [vmem:[#allocation3 + $0x8] sm:$0xff] %vm719, %v698
      %722 = vst.msk [vmem:[#allocation3 + $0x10] sm:$0xff] %vm719, %v700
      %723 = vst.msk [vmem:[#allocation3 + $0x18] sm:$0xff] %vm719, %v702
      %724 = vst.msk [vmem:[#allocation3 + $0x20] sm:$0xff] %vm719, %v704
      %725 = vst.msk [vmem:[#allocation3 + $0x28] sm:$0xff] %vm719, %v706
      %726 = vst.msk [vmem:[#allocation3 + $0x30] sm:$0xff] %vm719, %v708
      %727 = vst.msk [vmem:[#allocation3 + $0x38] sm:$0xff] %vm719, %v710
      %v728 = vld [vmem:[%s597 + $0x2] sm:$0xff]
      %v729 = vld [vmem:[%s597 + $0xa] sm:$0xff]
      %v730 = vld [vmem:[%s597 + $0x1a] sm:$0xff]
      %v731 = vld [vmem:[%s597 + $0x22] sm:$0xff]
      %v732 = vld [vmem:[%s597 + $0x32] sm:$0xff]
      %v733 = vld [vmem:[%s597 + $0x3a] sm:$0xff]
      %v734 = vld [vmem:[%s597 + $0x4a] sm:$0xff]
      %v735 = vld [vmem:[%s597 + $0x52] sm:$0xff]
      %v736 = vld [vmem:[%s597 + $0x62] sm:$0xff]
      %v737 = vld [vmem:[%s597 + $0x6a] sm:$0xff]
      %v738 = vld [vmem:[%s597 + $0x7a] sm:$0xff]
      %v739 = vld [vmem:[%s597 + $0x82] sm:$0xff]
      %v740 = vld [vmem:[%s597 + $0x92] sm:$0xff]
      %v741 = vld [vmem:[%s597 + $0x9a] sm:$0xff]
      %v742 = vld [vmem:[%s597 + $0xaa] sm:$0xff]
      %v743 = vld [vmem:[%s597 + $0xb2] sm:$0xff]
      %v744 = vpack.c.bf16 %v729, %v728
      %v745 = vpack.c.bf16 %v731, %v730
      %v746 = vpack.c.bf16 %v733, %v732
      %v747 = vpack.c.bf16 %v735, %v734
      %v748 = vpack.c.bf16 %v737, %v736
      %v749 = vpack.c.bf16 %v739, %v738
      %v750 = vpack.c.bf16 %v741, %v740
      %v751 = vpack.c.bf16 %v743, %v742
      %760 = vrot.lane.b32.xlu0 %v744, 20
      %v761 = vpop.permute.xlu0 %760
      %762 = vrot.lane.b32.xlu0 %v745, 20
      %v763 = vpop.permute.xlu0 %762
      %764 = vrot.lane.b32.xlu0 %v746, 20
      %v765 = vpop.permute.xlu0 %764
      %766 = vrot.lane.b32.xlu0 %v747, 20
      %v767 = vpop.permute.xlu0 %766
      %768 = vrot.lane.b32.xlu0 %v748, 20
      %v769 = vpop.permute.xlu0 %768
      %770 = vrot.lane.b32.xlu0 %v749, 20
      %v771 = vpop.permute.xlu0 %770
      %772 = vrot.lane.b32.xlu0 %v750, 20
      %v773 = vpop.permute.xlu0 %772
      %774 = vrot.lane.b32.xlu0 %v751, 20
      %v775 = vpop.permute.xlu0 %774
      %vm784 = vcmask 195744
      %785 = vst.msk [vmem:[#allocation3] sm:$0xff] %vm784, %v761
      %786 = vst.msk [vmem:[#allocation3 + $0x8] sm:$0xff] %vm784, %v763
      %787 = vst.msk [vmem:[#allocation3 + $0x10] sm:$0xff] %vm784, %v765
      %788 = vst.msk [vmem:[#allocation3 + $0x18] sm:$0xff] %vm784, %v767
      %789 = vst.msk [vmem:[#allocation3 + $0x20] sm:$0xff] %vm784, %v769
      %790 = vst.msk [vmem:[#allocation3 + $0x28] sm:$0xff] %vm784, %v771
      %791 = vst.msk [vmem:[#allocation3 + $0x30] sm:$0xff] %vm784, %v773
      %792 = vst.msk [vmem:[#allocation3 + $0x38] sm:$0xff] %vm784, %v775
      %s793 = sadd.s32 %s429, 2
      %s794 = smul.u32 %s793, 24
      %s795 = scalar_lea.vmem [#allocation2], %s794
      %v796 = vld [vmem:[%s795] sm:$0xff]
      %v797 = vld [vmem:[%s795 + $0x8] sm:$0xff]
      %v798 = vld [vmem:[%s795 + $0x18] sm:$0xff]
      %v799 = vld [vmem:[%s795 + $0x20] sm:$0xff]
      %v800 = vld [vmem:[%s795 + $0x30] sm:$0xff]
      %v801 = vld [vmem:[%s795 + $0x38] sm:$0xff]
      %v802 = vld [vmem:[%s795 + $0x48] sm:$0xff]
      %v803 = vld [vmem:[%s795 + $0x50] sm:$0xff]
      %v804 = vld [vmem:[%s795 + $0x60] sm:$0xff]
      %v805 = vld [vmem:[%s795 + $0x68] sm:$0xff]
      %v806 = vld [vmem:[%s795 + $0x78] sm:$0xff]
      %v807 = vld [vmem:[%s795 + $0x80] sm:$0xff]
      %v808 = vld [vmem:[%s795 + $0x90] sm:$0xff]
      %v809 = vld [vmem:[%s795 + $0x98] sm:$0xff]
      %v810 = vld [vmem:[%s795 + $0xa8] sm:$0xff]
      %v811 = vld [vmem:[%s795 + $0xb0] sm:$0xff]
      %v812 = vpack.c.bf16 %v797, %v796
      %v813 = vpack.c.bf16 %v799, %v798
      %v814 = vpack.c.bf16 %v801, %v800
      %v815 = vpack.c.bf16 %v803, %v802
      %v816 = vpack.c.bf16 %v805, %v804
      %v817 = vpack.c.bf16 %v807, %v806
      %v818 = vpack.c.bf16 %v809, %v808
      %v819 = vpack.c.bf16 %v811, %v810
      %828 = vrot.lane.b32.xlu0 %v812, 24
      %v829 = vpop.permute.xlu0 %828
      %830 = vrot.lane.b32.xlu0 %v813, 24
      %v831 = vpop.permute.xlu0 %830
      %832 = vrot.lane.b32.xlu0 %v814, 24
      %v833 = vpop.permute.xlu0 %832
      %834 = vrot.lane.b32.xlu0 %v815, 24
      %v835 = vpop.permute.xlu0 %834
      %836 = vrot.lane.b32.xlu0 %v816, 24
      %v837 = vpop.permute.xlu0 %836
      %838 = vrot.lane.b32.xlu0 %v817, 24
      %v839 = vpop.permute.xlu0 %838
      %840 = vrot.lane.b32.xlu0 %v818, 24
      %v841 = vpop.permute.xlu0 %840
      %842 = vrot.lane.b32.xlu0 %v819, 24
      %v843 = vpop.permute.xlu0 %842
      %vm852 = vcmask 228544
      %853 = vst.msk [vmem:[#allocation3] sm:$0xff] %vm852, %v829
      %854 = vst.msk [vmem:[#allocation3 + $0x8] sm:$0xff] %vm852, %v831
      %855 = vst.msk [vmem:[#allocation3 + $0x10] sm:$0xff] %vm852, %v833
      %856 = vst.msk [vmem:[#allocation3 + $0x18] sm:$0xff] %vm852, %v835
      %857 = vst.msk [vmem:[#allocation3 + $0x20] sm:$0xff] %vm852, %v837
      %858 = vst.msk [vmem:[#allocation3 + $0x28] sm:$0xff] %vm852, %v839
      %859 = vst.msk [vmem:[#allocation3 + $0x30] sm:$0xff] %vm852, %v841
      %860 = vst.msk [vmem:[#allocation3 + $0x38] sm:$0xff] %vm852, %v843
      %v861 = vld [vmem:[%s795 + $0x1] sm:$0xff]
      %v862 = vld [vmem:[%s795 + $0x9] sm:$0xff]
      %v863 = vld [vmem:[%s795 + $0x19] sm:$0xff]
      %v864 = vld [vmem:[%s795 + $0x21] sm:$0xff]
      %v865 = vld [vmem:[%s795 + $0x31] sm:$0xff]
      %v866 = vld [vmem:[%s795 + $0x39] sm:$0xff]
      %v867 = vld [vmem:[%s795 + $0x49] sm:$0xff]
      %v868 = vld [vmem:[%s795 + $0x51] sm:$0xff]
      %v869 = vld [vmem:[%s795 + $0x61] sm:$0xff]
      %v870 = vld [vmem:[%s795 + $0x69] sm:$0xff]
      %v871 = vld [vmem:[%s795 + $0x79] sm:$0xff]
      %v872 = vld [vmem:[%s795 + $0x81] sm:$0xff]
      %v873 = vld [vmem:[%s795 + $0x91] sm:$0xff]
      %v874 = vld [vmem:[%s795 + $0x99] sm:$0xff]
      %v875 = vld [vmem:[%s795 + $0xa9] sm:$0xff]
      %v876 = vld [vmem:[%s795 + $0xb1] sm:$0xff]
      %v877 = vpack.c.bf16 %v862, %v861
      %v878 = vpack.c.bf16 %v864, %v863
      %v879 = vpack.c.bf16 %v866, %v865
      %v880 = vpack.c.bf16 %v868, %v867
      %v881 = vpack.c.bf16 %v870, %v869
      %v882 = vpack.c.bf16 %v872, %v871
      %v883 = vpack.c.bf16 %v874, %v873
      %v884 = vpack.c.bf16 %v876, %v875
      %893 = vrot.lane.b32.xlu0 %v877, 28
      %v894 = vpop.permute.xlu0 %893
      %895 = vrot.lane.b32.xlu0 %v878, 28
      %v896 = vpop.permute.xlu0 %895
      %897 = vrot.lane.b32.xlu0 %v879, 28
      %v898 = vpop.permute.xlu0 %897
      %899 = vrot.lane.b32.xlu0 %v880, 28
      %v900 = vpop.permute.xlu0 %899
      %901 = vrot.lane.b32.xlu0 %v881, 28
      %v902 = vpop.permute.xlu0 %901
      %903 = vrot.lane.b32.xlu0 %v882, 28
      %v904 = vpop.permute.xlu0 %903
      %905 = vrot.lane.b32.xlu0 %v883, 28
      %v906 = vpop.permute.xlu0 %905
      %907 = vrot.lane.b32.xlu0 %v884, 28
      %v908 = vpop.permute.xlu0 %907
      %vm917 = vcmask 261344
      %918 = vst.msk [vmem:[#allocation3] sm:$0xff] %vm917, %v894
      %919 = vst.msk [vmem:[#allocation3 + $0x8] sm:$0xff] %vm917, %v896
      %920 = vst.msk [vmem:[#allocation3 + $0x10] sm:$0xff] %vm917, %v898
      %921 = vst.msk [vmem:[#allocation3 + $0x18] sm:$0xff] %vm917, %v900
      %922 = vst.msk [vmem:[#allocation3 + $0x20] sm:$0xff] %vm917, %v902
      %923 = vst.msk [vmem:[#allocation3 + $0x28] sm:$0xff] %vm917, %v904
      %924 = vst.msk [vmem:[#allocation3 + $0x30] sm:$0xff] %vm917, %v906
      %925 = vst.msk [vmem:[#allocation3 + $0x38] sm:$0xff] %vm917, %v908
      %v926 = vld [vmem:[%s795 + $0x2] sm:$0xff]
      %v927 = vld [vmem:[%s795 + $0xa] sm:$0xff]
      %v928 = vld [vmem:[%s795 + $0x1a] sm:$0xff]
      %v929 = vld [vmem:[%s795 + $0x22] sm:$0xff]
      %v930 = vld [vmem:[%s795 + $0x32] sm:$0xff]
      %v931 = vld [vmem:[%s795 + $0x3a] sm:$0xff]
      %v932 = vld [vmem:[%s795 + $0x4a] sm:$0xff]
      %v933 = vld [vmem:[%s795 + $0x52] sm:$0xff]
      %v934 = vld [vmem:[%s795 + $0x62] sm:$0xff]
      %v935 = vld [vmem:[%s795 + $0x6a] sm:$0xff]
      %v936 = vld [vmem:[%s795 + $0x7a] sm:$0xff]
      %v937 = vld [vmem:[%s795 + $0x82] sm:$0xff]
      %v938 = vld [vmem:[%s795 + $0x92] sm:$0xff]
      %v939 = vld [vmem:[%s795 + $0x9a] sm:$0xff]
      %v940 = vld [vmem:[%s795 + $0xaa] sm:$0xff]
      %v941 = vld [vmem:[%s795 + $0xb2] sm:$0xff]
      %v942 = vpack.c.bf16 %v927, %v926
      %v943 = vpack.c.bf16 %v929, %v928
      %v944 = vpack.c.bf16 %v931, %v930
      %v945 = vpack.c.bf16 %v933, %v932
      %v946 = vpack.c.bf16 %v935, %v934
      %v947 = vpack.c.bf16 %v937, %v936
      %v948 = vpack.c.bf16 %v939, %v938
      %v949 = vpack.c.bf16 %v941, %v940
      %958 = vrot.lane.b32.xlu0 %v942, 32
      %v959 = vpop.permute.xlu0 %958
      %960 = vrot.lane.b32.xlu0 %v943, 32
      %v961 = vpop.permute.xlu0 %960
      %962 = vrot.lane.b32.xlu0 %v944, 32
      %v963 = vpop.permute.xlu0 %962
      %964 = vrot.lane.b32.xlu0 %v945, 32
      %v965 = vpop.permute.xlu0 %964
      %966 = vrot.lane.b32.xlu0 %v946, 32
      %v967 = vpop.permute.xlu0 %966
      %968 = vrot.lane.b32.xlu0 %v947, 32
      %v969 = vpop.permute.xlu0 %968
      %970 = vrot.lane.b32.xlu0 %v948, 32
      %v971 = vpop.permute.xlu0 %970
      %972 = vrot.lane.b32.xlu0 %v949, 32
      %v973 = vpop.permute.xlu0 %972
      %vm982 = vcmask 294144
      %983 = vst.msk [vmem:[#allocation3] sm:$0xff] %vm982, %v959
      %984 = vst.msk [vmem:[#allocation3 + $0x8] sm:$0xff] %vm982, %v961
      %985 = vst.msk [vmem:[#allocation3 + $0x10] sm:$0xff] %vm982, %v963
      %986 = vst.msk [vmem:[#allocation3 + $0x18] sm:$0xff] %vm982, %v965
      %987 = vst.msk [vmem:[#allocation3 + $0x20] sm:$0xff] %vm982, %v967
      %988 = vst.msk [vmem:[#allocation3 + $0x28] sm:$0xff] %vm982, %v969
      %989 = vst.msk [vmem:[#allocation3 + $0x30] sm:$0xff] %vm982, %v971
      %990 = vst.msk [vmem:[#allocation3 + $0x38] sm:$0xff] %vm982, %v973
      %v991 = vld [vmem:[#allocation3] sm:$0xff]
      %v992 = vld [vmem:[#allocation3 + $0x8] sm:$0xff]
      %v993 = vld [vmem:[#allocation3 + $0x10] sm:$0xff]
      %v994 = vld [vmem:[#allocation3 + $0x18] sm:$0xff]
      %v995 = vld [vmem:[#allocation3 + $0x20] sm:$0xff]
      %v996 = vld [vmem:[#allocation3 + $0x28] sm:$0xff]
      %v997 = vld [vmem:[#allocation3 + $0x30] sm:$0xff]
      %v998 = vld [vmem:[#allocation3 + $0x38] sm:$0xff]
      %v999 = vld [vmem:[%s1] sm:$0xf]
      %v1000 = vld [vmem:[%s1 + $0x4] sm:$0xf]
      %v1001 = vld [vmem:[%s1 + $0x8] sm:$0xf]
      %v1002 = vld [vmem:[%s1 + $0xc] sm:$0xf]
      %v1003 = vld [vmem:[%s1 + $0x10] sm:$0x3]
      %v1004 = vld [vmem:[%s2] sm:$0x1]
      %v1006 = vlaneseq
      %v1007 = vshrl.u32 %v1006, 7
      %v1008 = vsub.s32 0, %v1007
      %v1009 = vrot.slane %v1004, %v1008
      %v1016 = vunpack.c.l.b16 %v999
      %v1017 = vunpack.c.l.b16 %v1000
      %v1018 = vunpack.c.l.b16 %v1001
      %v1019 = vunpack.c.l.b16 %v1002
      %v1020 = vunpack.c.l.b16 %v1003
      %v1021 = vpack.c.b16 %v1017, %v1016
      %v1022 = vpack.c.b16 %v1019, %v1018
      %v1023 = vpack.c.b16 %v1020, %v1020
      %vm1026 = vcmask 293888
      %v1028 = vsel %vm1026, %v991, 0
      %v1031 = vsel %vm1026, %v992, 0
      %v1034 = vsel %vm1026, %v993, 0
      %v1037 = vsel %vm1026, %v994, 0
      %v1040 = vsel %vm1026, %v995, 0
      %v1043 = vsel %vm1026, %v996, 0
      %v1046 = vsel %vm1026, %v997, 0
      %v1049 = vsel %vm1026, %v998, 0
      %vm1051 = vcmask 1041408
      %v1053 = vsel %vm1051, %v1023, 0
      %1055 = vmatprep.subr.bf16.mxu0 0
      %1056 = vmatpush1.bf16.msra.mxu0 %v1021
      %1057 = vmatprep.subr.bf16.mxu0 0
      %1058 = vmatpush1.bf16.msra.mxu0 %v1022
      %1059 = vmatprep.subr.bf16.mxu0 0
      %1060 = vmatpush1.bf16.msra.mxu0 %v1053
      %1061 = vmatprep.subr.bf16.mxu0 0
      %1062 = vmatpush1.bf16.msra.mxu0 0
      %1063 = vmatprep.subr.bf16.mxu0 0
      %1064 = vmatpush1.bf16.msra.mxu0 0
      %1065 = vmatprep.subr.bf16.mxu0 0
      %1066 = vmatpush1.bf16.msra.mxu0 0
      %1067 = vmatprep.subr.bf16.mxu0 0
      %1068 = vmatpush1.bf16.msra.mxu0 0
      %1069 = vmatprep.subr.bf16.mxu0 0
      %1070 = vmatpush1.bf16.msra.mxu0 0
      %1071 = vmatprep.subr.bf16.mxu0 0
      %1072 = vmatpush1.bf16.msra.mxu0 0
      %1073 = vmatprep.subr.bf16.mxu0 0
      %1074 = vmatpush1.bf16.msra.mxu0 0
      %1075 = vmatprep.subr.bf16.mxu0 0
      %1076 = vmatpush1.bf16.msra.mxu0 0
      %1077 = vmatprep.subr.bf16.mxu0 0
      %1078 = vmatpush1.bf16.msra.mxu0 0
      %1079 = vmatprep.subr.bf16.mxu0 0
      %1080 = vmatpush1.bf16.msra.mxu0 0
      %1081 = vmatprep.subr.bf16.mxu0 0
      %1082 = vmatpush1.bf16.msra.mxu0 0
      %1083 = vmatprep.subr.bf16.mxu0 0
      %1084 = vmatpush1.bf16.msra.mxu0 0
      %1085 = vmatprep.subr.bf16.mxu0 0
      %1086 = vmatpush1.bf16.msra.mxu0 0
      %1087 = vmatprep.mubr.bf16.mxu0 0
      %1088 = vmatmul.mubr.bf16.gmra.mrb[0].mxu0 %v1028
      %v1089 = vpop.f32.mrb[0].mxu0
      %v1090 = vadd.f32 %v1009, %v1089
      %v1091 = vpop.f32.mrb[0].mxu0
      %v1092 = vpop.f32.mrb[0].mxu0
      %v1093 = vadd.f32 %v1009, %v1092
      %v1094 = vpop.f32.mrb[0].mxu0
      %1095 = vmatprep.mubr.bf16.mxu0 0
      %1096 = vmatmul.mubr.bf16.gmra.mrb[0].mxu0 %v1031
      %v1097 = vpop.f32.mrb[0].mxu0
      %v1098 = vadd.f32 %v1009, %v1097
      %v1099 = vpop.f32.mrb[0].mxu0
      %v1100 = vpop.f32.mrb[0].mxu0
      %v1101 = vadd.f32 %v1009, %v1100
      %v1102 = vpop.f32.mrb[0].mxu0
      %1103 = vmatprep.mubr.bf16.mxu0 0
      %1104 = vmatmul.mubr.bf16.gmra.mrb[0].mxu0 %v1034
      %v1105 = vpop.f32.mrb[0].mxu0
      %v1106 = vadd.f32 %v1009, %v1105
      %v1107 = vpop.f32.mrb[0].mxu0
      %v1108 = vpop.f32.mrb[0].mxu0
      %v1109 = vadd.f32 %v1009, %v1108
      %v1110 = vpop.f32.mrb[0].mxu0
      %1111 = vmatprep.mubr.bf16.mxu0 0
      %1112 = vmatmul.mubr.bf16.gmra.mrb[0].mxu0 %v1037
      %v1113 = vpop.f32.mrb[0].mxu0
      %v1114 = vadd.f32 %v1009, %v1113
      %v1115 = vpop.f32.mrb[0].mxu0
      %v1116 = vpop.f32.mrb[0].mxu0
      %v1117 = vadd.f32 %v1009, %v1116
      %v1118 = vpop.f32.mrb[0].mxu0
      %1119 = vmatprep.mubr.bf16.mxu0 0
      %1120 = vmatmul.mubr.bf16.gmra.mrb[0].mxu0 %v1040
      %v1121 = vpop.f32.mrb[0].mxu0
      %v1122 = vadd.f32 %v1009, %v1121
      %v1123 = vpop.f32.mrb[0].mxu0
      %v1124 = vpop.f32.mrb[0].mxu0
      %v1125 = vadd.f32 %v1009, %v1124
      %v1126 = vpop.f32.mrb[0].mxu0
      %1127 = vmatprep.mubr.bf16.mxu0 0
      %1128 = vmatmul.mubr.bf16.gmra.mrb[0].mxu0 %v1043
      %v1129 = vpop.f32.mrb[0].mxu0
      %v1130 = vadd.f32 %v1009, %v1129
      %v1131 = vpop.f32.mrb[0].mxu0
      %v1132 = vpop.f32.mrb[0].mxu0
      %v1133 = vadd.f32 %v1009, %v1132
      %v1134 = vpop.f32.mrb[0].mxu0
      %1135 = vmatprep.mubr.bf16.mxu0 0
      %1136 = vmatmul.mubr.bf16.gmra.mrb[0].mxu0 %v1046
      %v1137 = vpop.f32.mrb[0].mxu0
      %v1138 = vadd.f32 %v1009, %v1137
      %v1139 = vpop.f32.mrb[0].mxu0
      %v1140 = vpop.f32.mrb[0].mxu0
      %v1141 = vadd.f32 %v1009, %v1140
      %v1142 = vpop.f32.mrb[0].mxu0
      %1143 = vmatprep.mubr.bf16.mxu0 0
      %1144 = vmatmul.mubr.bf16.gmra.mrb[0].mxu0 %v1049
      %v1145 = vpop.f32.mrb[0].mxu0
      %v1146 = vadd.f32 %v1009, %v1145
      %v1147 = vpop.f32.mrb[0].mxu0
      %v1148 = vpop.f32.mrb[0].mxu0
      %v1149 = vadd.f32 %v1009, %v1148
      %v1150 = vpop.f32.mrb[0].mxu0
      %1151 = vdwg.mxu0
      %v1152 = vmax.f32 %v1090, 0.0
      %v1153 = vmax.f32 %v1093, 0.0
      %v1154 = vmax.f32 %v1098, 0.0
      %v1155 = vmax.f32 %v1101, 0.0
      %v1156 = vmax.f32 %v1106, 0.0
      %v1157 = vmax.f32 %v1109, 0.0
      %v1158 = vmax.f32 %v1114, 0.0
      %v1159 = vmax.f32 %v1117, 0.0
      %v1160 = vmax.f32 %v1122, 0.0
      %v1161 = vmax.f32 %v1125, 0.0
      %v1162 = vmax.f32 %v1130, 0.0
      %v1163 = vmax.f32 %v1133, 0.0
      %v1164 = vmax.f32 %v1138, 0.0
      %v1165 = vmax.f32 %v1141, 0.0
      %v1166 = vmax.f32 %v1146, 0.0
      %v1167 = vmax.f32 %v1149, 0.0
      %v1168 = vpack.c.bf16 %v1153, %v1152
      %v1169 = vpack.c.bf16 %v1155, %v1154
      %v1170 = vpack.c.bf16 %v1157, %v1156
      %v1171 = vpack.c.bf16 %v1159, %v1158
      %v1172 = vpack.c.bf16 %v1161, %v1160
      %v1173 = vpack.c.bf16 %v1163, %v1162
      %v1174 = vpack.c.bf16 %v1165, %v1164
      %v1175 = vpack.c.bf16 %v1167, %v1166
      %v1176 = vld [vmem:[%s3] sm:$0xf]
      %v1177 = vld [vmem:[%s3 + $0x4] sm:$0xf]
      %v1178 = vld [vmem:[%s3 + $0x8] sm:$0xf]
      %v1179 = vld [vmem:[%s3 + $0xc] sm:$0xf]
      %v1180 = vld [vmem:[%s4] sm:$0x1]
      %v1182 = vlaneseq
      %v1183 = vshrl.u32 %v1182, 7
      %v1184 = vsub.s32 0, %v1183
      %v1185 = vrot.slane %v1180, %v1184
      %v1191 = vunpack.c.l.b16 %v1176
      %v1192 = vunpack.c.l.b16 %v1177
      %v1193 = vunpack.c.l.b16 %v1178
      %v1194 = vunpack.c.l.b16 %v1179
      %v1195 = vpack.c.b16 %v1192, %v1191
      %v1196 = vpack.c.b16 %v1194, %v1193
      %vm1199 = vcmask 261120
      %v1201 = vsel %vm1199, %v1168, 0
      %v1204 = vsel %vm1199, %v1169, 0
      %v1207 = vsel %vm1199, %v1170, 0
      %v1210 = vsel %vm1199, %v1171, 0
      %v1213 = vsel %vm1199, %v1172, 0
      %v1216 = vsel %vm1199, %v1173, 0
      %v1219 = vsel %vm1199, %v1174, 0
      %v1222 = vsel %vm1199, %v1175, 0
      %1224 = vmatprep.subr.bf16.mxu0 0
      %1225 = vmatpush1.bf16.msra.mxu0 %v1195
      %1226 = vmatprep.subr.bf16.mxu0 0
      %1227 = vmatpush1.bf16.msra.mxu0 %v1196
      %1228 = vmatprep.subr.bf16.mxu0 0
      %1229 = vmatpush1.bf16.msra.mxu0 0
      %1230 = vmatprep.subr.bf16.mxu0 0
      %1231 = vmatpush1.bf16.msra.mxu0 0
      %1232 = vmatprep.subr.bf16.mxu0 0
      %1233 = vmatpush1.bf16.msra.mxu0 0
      %1234 = vmatprep.subr.bf16.mxu0 0
      %1235 = vmatpush1.bf16.msra.mxu0 0
      %1236 = vmatprep.subr.bf16.mxu0 0
      %1237 = vmatpush1.bf16.msra.mxu0 0
      %1238 = vmatprep.subr.bf16.mxu0 0
      %1239 = vmatpush1.bf16.msra.mxu0 0
      %1240 = vmatprep.subr.bf16.mxu0 0
      %1241 = vmatpush1.bf16.msra.mxu0 0
      %1242 = vmatprep.subr.bf16.mxu0 0
      %1243 = vmatpush1.bf16.msra.mxu0 0
      %1244 = vmatprep.subr.bf16.mxu0 0
      %1245 = vmatpush1.bf16.msra.mxu0 0
      %1246 = vmatprep.subr.bf16.mxu0 0
      %1247 = vmatpush1.bf16.msra.mxu0 0
      %1248 = vmatprep.subr.bf16.mxu0 0
      %1249 = vmatpush1.bf16.msra.mxu0 0
      %1250 = vmatprep.subr.bf16.mxu0 0
      %1251 = vmatpush1.bf16.msra.mxu0 0
      %1252 = vmatprep.subr.bf16.mxu0 0
      %1253 = vmatpush1.bf16.msra.mxu0 0
      %1254 = vmatprep.subr.bf16.mxu0 0
      %1255 = vmatpush1.bf16.msra.mxu0 0
      %1256 = vmatprep.mubr.bf16.mxu0 0
      %1257 = vmatmul.mubr.bf16.gmra.mrb[0].mxu0 %v1201
      %v1258 = vpop.f32.mrb[0].mxu0
      %v1259 = vadd.f32 %v1185, %v1258
      %v1260 = vpop.f32.mrb[0].mxu0
      %v1261 = vpop.f32.mrb[0].mxu0
      %v1262 = vadd.f32 %v1185, %v1261
      %v1263 = vpop.f32.mrb[0].mxu0
      %1264 = vmatprep.mubr.bf16.mxu0 0
      %1265 = vmatmul.mubr.bf16.gmra.mrb[0].mxu0 %v1204
      %v1266 = vpop.f32.mrb[0].mxu0
      %v1267 = vadd.f32 %v1185, %v1266
      %v1268 = vpop.f32.mrb[0].mxu0
      %v1269 = vpop.f32.mrb[0].mxu0
      %v1270 = vadd.f32 %v1185, %v1269
      %v1271 = vpop.f32.mrb[0].mxu0
      %1272 = vmatprep.mubr.bf16.mxu0 0
      %1273 = vmatmul.mubr.bf16.gmra.mrb[0].mxu0 %v1207
      %v1274 = vpop.f32.mrb[0].mxu0
      %v1275 = vadd.f32 %v1185, %v1274
      %v1276 = vpop.f32.mrb[0].mxu0
      %v1277 = vpop.f32.mrb[0].mxu0
      %v1278 = vadd.f32 %v1185, %v1277
      %v1279 = vpop.f32.mrb[0].mxu0
      %1280 = vmatprep.mubr.bf16.mxu0 0
      %1281 = vmatmul.mubr.bf16.gmra.mrb[0].mxu0 %v1210
      %v1282 = vpop.f32.mrb[0].mxu0
      %v1283 = vadd.f32 %v1185, %v1282
      %v1284 = vpop.f32.mrb[0].mxu0
      %v1285 = vpop.f32.mrb[0].mxu0
      %v1286 = vadd.f32 %v1185, %v1285
      %v1287 = vpop.f32.mrb[0].mxu0
      %1288 = vmatprep.mubr.bf16.mxu0 0
      %1289 = vmatmul.mubr.bf16.gmra.mrb[0].mxu0 %v1213
      %v1290 = vpop.f32.mrb[0].mxu0
      %v1291 = vadd.f32 %v1185, %v1290
      %v1292 = vpop.f32.mrb[0].mxu0
      %v1293 = vpop.f32.mrb[0].mxu0
      %v1294 = vadd.f32 %v1185, %v1293
      %v1295 = vpop.f32.mrb[0].mxu0
      %1296 = vmatprep.mubr.bf16.mxu0 0
      %1297 = vmatmul.mubr.bf16.gmra.mrb[0].mxu0 %v1216
      %v1298 = vpop.f32.mrb[0].mxu0
      %v1299 = vadd.f32 %v1185, %v1298
      %v1300 = vpop.f32.mrb[0].mxu0
      %v1301 = vpop.f32.mrb[0].mxu0
      %v1302 = vadd.f32 %v1185, %v1301
      %v1303 = vpop.f32.mrb[0].mxu0
      %1304 = vmatprep.mubr.bf16.mxu0 0
      %1305 = vmatmul.mubr.bf16.gmra.mrb[0].mxu0 %v1219
      %v1306 = vpop.f32.mrb[0].mxu0
      %v1307 = vadd.f32 %v1185, %v1306
      %v1308 = vpop.f32.mrb[0].mxu0
      %v1309 = vpop.f32.mrb[0].mxu0
      %v1310 = vadd.f32 %v1185, %v1309
      %v1311 = vpop.f32.mrb[0].mxu0
      %1312 = vmatprep.mubr.bf16.mxu0 0
      %1313 = vmatmul.mubr.bf16.gmra.mrb[0].mxu0 %v1222
      %v1314 = vpop.f32.mrb[0].mxu0
      %v1315 = vadd.f32 %v1185, %v1314
      %v1316 = vpop.f32.mrb[0].mxu0
      %v1317 = vpop.f32.mrb[0].mxu0
      %v1318 = vadd.f32 %v1185, %v1317
      %v1319 = vpop.f32.mrb[0].mxu0
      %1320 = vdwg.mxu0
      %vm1321 = vcmask 64512
      %1322 = vst.msk [vmem:[%s290] sm:$0xff] %vm1321, %v1259
      %1323 = vst.msk [vmem:[%s290 + $0x8] sm:$0xff] %vm1321, %v1262
      %1324 = vst.msk [vmem:[%s290 + $0x10] sm:$0xff] %vm1321, %v1267
      %1325 = vst.msk [vmem:[%s290 + $0x18] sm:$0xff] %vm1321, %v1270
      %1326 = vst.msk [vmem:[%s290 + $0x20] sm:$0xff] %vm1321, %v1275
      %1327 = vst.msk [vmem:[%s290 + $0x28] sm:$0xff] %vm1321, %v1278
      %1328 = vst.msk [vmem:[%s290 + $0x30] sm:$0xff] %vm1321, %v1283
      %1329 = vst.msk [vmem:[%s290 + $0x38] sm:$0xff] %vm1321, %v1286
      %1330 = vst.msk [vmem:[%s290 + $0x40] sm:$0xff] %vm1321, %v1291
      %1331 = vst.msk [vmem:[%s290 + $0x48] sm:$0xff] %vm1321, %v1294
      %1332 = vst.msk [vmem:[%s290 + $0x50] sm:$0xff] %vm1321, %v1299
      %1333 = vst.msk [vmem:[%s290 + $0x58] sm:$0xff] %vm1321, %v1302
      %1334 = vst.msk [vmem:[%s290 + $0x60] sm:$0xff] %vm1321, %v1307
      %1335 = vst.msk [vmem:[%s290 + $0x68] sm:$0xff] %vm1321, %v1310
      %1336 = vst.msk [vmem:[%s290 + $0x70] sm:$0xff] %vm1321, %v1315
      %1337 = vst.msk [vmem:[%s290 + $0x78] sm:$0xff] %vm1321, %v1318
      %1354 = vrot.lane.b32.xlu0 %v1259, 120
      %v1355 = vpop.permute.xlu0 %1354
      %1356 = vrot.lane.b32.xlu0 %v1262, 120
      %v1357 = vpop.permute.xlu0 %1356
      %1358 = vrot.lane.b32.xlu0 %v1267, 120
      %v1359 = vpop.permute.xlu0 %1358
      %1360 = vrot.lane.b32.xlu0 %v1270, 120
      %v1361 = vpop.permute.xlu0 %1360
      %1362 = vrot.lane.b32.xlu0 %v1275, 120
      %v1363 = vpop.permute.xlu0 %1362
      %1364 = vrot.lane.b32.xlu0 %v1278, 120
      %v1365 = vpop.permute.xlu0 %1364
      %1366 = vrot.lane.b32.xlu0 %v1283, 120
      %v1367 = vpop.permute.xlu0 %1366
      %1368 = vrot.lane.b32.xlu0 %v1286, 120
      %v1369 = vpop.permute.xlu0 %1368
      %1370 = vrot.lane.b32.xlu0 %v1291, 120
      %v1371 = vpop.permute.xlu0 %1370
      %1372 = vrot.lane.b32.xlu0 %v1294, 120
      %v1373 = vpop.permute.xlu0 %1372
      %1374 = vrot.lane.b32.xlu0 %v1299, 120
      %v1375 = vpop.permute.xlu0 %1374
      %1376 = vrot.lane.b32.xlu0 %v1302, 120
      %v1377 = vpop.permute.xlu0 %1376
      %1378 = vrot.lane.b32.xlu0 %v1307, 120
      %v1379 = vpop.permute.xlu0 %1378
      %1380 = vrot.lane.b32.xlu0 %v1310, 120
      %v1381 = vpop.permute.xlu0 %1380
      %1382 = vrot.lane.b32.xlu0 %v1315, 120
      %v1383 = vpop.permute.xlu0 %1382
      %1384 = vrot.lane.b32.xlu0 %v1318, 120
      %v1385 = vpop.permute.xlu0 %1384
      %vm1402 = vcmask 97280
      %1403 = vst.msk [vmem:[%s301] sm:$0xff] %vm1402, %v1355
      %1404 = vst.msk [vmem:[%s301 + $0x8] sm:$0xff] %vm1402, %v1357
      %1405 = vst.msk [vmem:[%s301 + $0x10] sm:$0xff] %vm1402, %v1359
      %1406 = vst.msk [vmem:[%s301 + $0x18] sm:$0xff] %vm1402, %v1361
      %1407 = vst.msk [vmem:[%s301 + $0x20] sm:$0xff] %vm1402, %v1363
      %1408 = vst.msk [vmem:[%s301 + $0x28] sm:$0xff] %vm1402, %v1365
      %1409 = vst.msk [vmem:[%s301 + $0x30] sm:$0xff] %vm1402, %v1367
      %1410 = vst.msk [vmem:[%s301 + $0x38] sm:$0xff] %vm1402, %v1369
      %1411 = vst.msk [vmem:[%s301 + $0x40] sm:$0xff] %vm1402, %v1371
      %1412 = vst.msk [vmem:[%s301 + $0x48] sm:$0xff] %vm1402, %v1373
      %1413 = vst.msk [vmem:[%s301 + $0x50] sm:$0xff] %vm1402, %v1375
      %1414 = vst.msk [vmem:[%s301 + $0x58] sm:$0xff] %vm1402, %v1377
      %1415 = vst.msk [vmem:[%s301 + $0x60] sm:$0xff] %vm1402, %v1379
      %1416 = vst.msk [vmem:[%s301 + $0x68] sm:$0xff] %vm1402, %v1381
      %1417 = vst.msk [vmem:[%s301 + $0x70] sm:$0xff] %vm1402, %v1383
      %1418 = vst.msk [vmem:[%s301 + $0x78] sm:$0xff] %vm1402, %v1385
      %s1419 = smul.u32 8, %s23
      %p1420 = scmp.lt.s32.totalorder %s22, 1
      %s1421 = scalar_select %p1420, %s22, 1
      %p1422 = scmp.lt.s32.totalorder %s1419, 15
      %s1423 = scalar_select %p1422, %s1419, 15
      %s1424 = smul.addr %s1423, 2
      %s1425 = smul.addr %s1421, 32
      %s1426 = sadd.s32 %s1424, %s1425
      %s1427 = smul.addr %s1426, 8
      %s1428 = scalar_lea.vmem %s5, %s1427
      %s1429 = smul.u32 8, %s23
      %p1430 = scmp.lt.s32.totalorder %s22, 1
      %s1431 = scalar_select %p1430, %s22, 1
      %p1432 = scmp.lt.s32.totalorder %s1429, 15
      %s1433 = scalar_select %p1432, %s1429, 15
      %s1434 = smul.addr %s1433, 2
      %s1435 = smul.addr %s1431, 32
      %s1436 = sadd.s32 %s1434, %s1435
      %s1437 = smul.addr %s1436, 8
      %s1438 = scalar_lea.vmem %s6, %s1437
      // Predicated region
      $region45: #{tpu_custom_call.1} parent=39 // pred_check
        %p1439 = pneg %p160
      $region46: #{tpu_custom_call.1} parent=39 // pred_check_branch
        %1441 = sbr.rel (%p1439) target = $region48
      $region47: #{tpu_custom_call.1} parent=39 // pred_region
        %s1442 = smul.u32 8, %s23
      $region48: #{tpu_custom_call.1} parent=39 // pred_fallthru
        _
      // Predicated region
      $region49: #{tpu_custom_call.1} parent=39 // pred_check
        %p1443 = pneg %p188
      $region50: #{tpu_custom_call.1} parent=39 // pred_check_branch
        %1445 = sbr.rel (%p1443) target = $region52
      $region51: #{tpu_custom_call.1} parent=39 // pred_region
        %s1446 = smul.u32 8, %s23
      $region52: #{tpu_custom_call.1} parent=39 // pred_fallthru
        _
    $region40: #{tpu_custom_call.1} parent=5 // pred_fallthru
      _
    %p1447 = scmp.le.s32.totalorder 2, %s13
    // Predicated region
    $region53: #{tpu_custom_call.1} parent=5 // pred_check
      %p1448 = pneg %p1447
    $region54: #{tpu_custom_call.1} parent=5 // pred_check_branch
      %1450 = sbr.rel (%p1448) target = $region56
    $region55: #{tpu_custom_call.1} parent=5 // pred_region
      %s1451 = ssub.s32 %s13, 2
      // Predicated region
      $region57: #{tpu_custom_call.1} parent=55 // pred_check
        %p1452 = pneg %p166
      $region58: #{tpu_custom_call.1} parent=55 // pred_check_branch
        %1454 = sbr.rel (%p1452) target = $region60
      $region59: #{tpu_custom_call.1} parent=55 // pred_region
        %s1455 = smul.u32 8, %s25
        %p1456 = scmp.lt.s32.totalorder %s24, 1
        %s1457 = scalar_select %p1456, %s24, 1
        %p1458 = scmp.lt.s32.totalorder %s1455, 15
        %s1459 = scalar_select %p1458, %s1455, 15
        %s1460 = smul.addr %s1459, 2
        %s1461 = smul.addr %s1457, 32
        %s1462 = sadd.s32 %s1460, %s1461
        %s1463 = smul.addr %s1462, 8
        %s1464 = scalar_lea.vmem %s5, %s1463
      $region60: #{tpu_custom_call.1} parent=55 // pred_fallthru
        _
      // Predicated region
      $region61: #{tpu_custom_call.1} parent=55 // pred_check
        %p1465 = pneg %p194
      $region62: #{tpu_custom_call.1} parent=55 // pred_check_branch
        %1467 = sbr.rel (%p1465) target = $region64
      $region63: #{tpu_custom_call.1} parent=55 // pred_region
        %s1468 = smul.u32 8, %s25
        %p1469 = scmp.lt.s32.totalorder %s24, 1
        %s1470 = scalar_select %p1469, %s24, 1
        %p1471 = scmp.lt.s32.totalorder %s1468, 15
        %s1472 = scalar_select %p1471, %s1468, 15
        %s1473 = smul.addr %s1472, 2
        %s1474 = smul.addr %s1470, 32
        %s1475 = sadd.s32 %s1473, %s1474
        %s1476 = smul.addr %s1475, 8
        %s1477 = scalar_lea.vmem %s6, %s1476
      $region64: #{tpu_custom_call.1} parent=55 // pred_fallthru
        _
    $region56: #{tpu_custom_call.1} parent=5 // pred_fallthru
      _
  $region6: #{tpu_custom_call.1} parent=0 // loop_footer
    %s17 = sadd.s32 1, %s13
  $region7: #{tpu_custom_call.1} parent=0 // loop_footer_branch
    %12 = sbr.rel target = $region3
  $region8: #{tpu_custom_call.1} parent=0 // loop_exit
    _

</llo_original>
